<compile_context>
chip_gen: v7x
topology: tpu7x:2x2x1
jax: 0.10.0
libtpu: 0.0.40
codegen_flags: <defaults>
</compile_context>

<pallas_src>
import functools

import jax
import jax.numpy as jnp
from jax.experimental import pallas as pl
from jax.experimental.pallas import tpu as pltpu

_EPS = 1e-5      # nn.BatchNorm2d default eps
_LANE = 128      # TPU lane width / v5e MXU tile


def _ceil_to(v, m):
    return ((v + m - 1) // m) * m


def _vmem_limit_bytes():
    """~75% of physical VMEM (96 MiB on v5e/v6e, 48 MiB on v7x)."""
    cap = 64 * 1024 * 1024
    try:
        cap = int(getattr(pltpu.get_tpu_info(), "vmem_capacity_bytes", cap))
    except Exception:
        pass
    return cap * 3 // 4


# --------------------------- in-kernel helpers ------------------------------
def _im2col_3x3(x):
    """(H, W, C) -> (H*W, 9*C) patch matrix, taps ordered (ky, kx, c).

    Built from 3 W-shifted slices reused across 3 H-shifts; with C a multiple
    of 128 every lane concat is aligned vreg placement.
    """
    H, W, C = x.shape
    zw = jnp.zeros((H, 1, C), x.dtype)
    xw = jnp.concatenate([zw, x, zw], axis=1)                        # (H, W+2, C)
    cols = jnp.concatenate([xw[:, kx:kx + W, :] for kx in range(3)],
                           axis=-1)                                  # (H, W, 3C)
    zh = jnp.zeros((1, W, 3 * C), x.dtype)
    xh = jnp.concatenate([zh, cols, zh], axis=0)                     # (H+2, W, 3C)
    rows = jnp.concatenate([xh[ky:ky + H, :, :] for ky in range(3)],
                           axis=-1)                                  # (H, W, 9C)
    return rows.reshape(H * W, 9 * C)


def _col_stats(y, chunk=1024):
    """Per-channel [sum; sum-of-squares] of a (N, C) f32 tile, in row chunks."""
    n, c = y.shape
    s = jnp.zeros((1, c), jnp.float32)
    q = jnp.zeros((1, c), jnp.float32)
    for i in range(0, n, chunk):
        yc = y[i:i + chunk, :]
        s = s + jnp.sum(yc, axis=0, keepdims=True)
        q = q + jnp.sum(yc * yc, axis=0, keepdims=True)
    return jnp.concatenate([s, q], axis=0)                           # (2, C)


# ------------------------------ kernels -------------------------------------
def _stage1_kernel(has_projection, *refs):
    """conv1 (im2col matmul) [+ 1x1 projection] + per-image BN partial stats."""
    if has_projection:
        x_ref, w1_ref, wsc_ref, y1_ref, st1_ref, sc_ref, stsc_ref = refs
    else:
        x_ref, w1_ref, y1_ref, st1_ref = refs

    _, H, W, Cp = x_ref.shape
    xb = x_ref[0].astype(jnp.bfloat16)            # cast BEFORE im2col
    patch = _im2col_3x3(xb)                       # (H*W, 9*Cp) bf16
    y1 = jnp.dot(patch, w1_ref[...], preferred_element_type=jnp.float32)
    y1_ref[0] = y1
    st1_ref[0] = _col_stats(y1)

    if has_projection:
        sc = jnp.dot(xb.reshape(H * W, Cp), wsc_ref[...],
                     preferred_element_type=jnp.float32)
        sc_ref[0] = sc
        stsc_ref[0] = _col_stats(sc)


def _stage2_kernel(H, W, y1_ref, s1_ref, b1_ref, w2_ref, y2_ref, st2_ref):
    """bn1 (fused scale/shift) + ReLU + conv2 (im2col matmul) + partial stats."""
    Cp = y1_ref.shape[-1]
    h = jnp.maximum(y1_ref[0] * s1_ref[...] + b1_ref[...], 0.0)      # f32
    patch = _im2col_3x3(h.astype(jnp.bfloat16).reshape(H, W, Cp))
    y2 = jnp.dot(patch, w2_ref[...], preferred_element_type=jnp.float32)
    y2_ref[0] = y2
    st2_ref[0] = _col_stats(y2)


def _stage3_kernel(y2_ref, s2_ref, b2_ref, z_ref, sz_ref, bz_ref, o_ref):
    """bn2 + shortcut (identity or bn(1x1 proj)) + ReLU; lane-dense output."""
    out = (y2_ref[0] * s2_ref[...] + b2_ref[...]
           + z_ref[0] * sz_ref[...] + bz_ref[...])
    o_ref[0] = jnp.maximum(out, 0.0)


# ------------------------------ wrapper --------------------------------------
def _pack3x3(w, cin_p, cout_p):
    # torch (Cout, Cin, 3, 3) -> (9*cin_p, cout_p), rows ordered (ky, kx, cin)
    cout, cin = w.shape[0], w.shape[1]
    w = jnp.transpose(w, (2, 3, 1, 0))                    # (3, 3, cin, cout)
    w = jnp.pad(w, ((0, 0), (0, 0), (0, cin_p - cin), (0, cout_p - cout)))
    return w.reshape(9 * cin_p, cout_p).astype(jnp.bfloat16)


def _pack1x1(w, cin_p, cout_p):
    cout, cin = w.shape[0], w.shape[1]
    w = jnp.transpose(w[:, :, 0, 0], (1, 0))              # (cin, cout)
    return jnp.pad(w, ((0, cin_p - cin), (0, cout_p - cout))).astype(jnp.bfloat16)


def _bn_scale_shift(stats, gamma, beta, count, c_pad):
    """Reduce per-image partial stats -> fused BN scale/shift, shape (1, c_pad)."""
    tot = jnp.sum(stats, axis=0)                          # (2, c_pad)
    mean = tot[0] / count
    var = jnp.maximum(tot[1] / count - mean * mean, 0.0)  # clamp before rsqrt
    g = jnp.pad(gamma.astype(jnp.float32), (0, c_pad - gamma.shape[0]))
    b = jnp.pad(beta.astype(jnp.float32), (0, c_pad - beta.shape[0]))
    scale = g * jax.lax.rsqrt(var + _EPS)
    shift = b - mean * scale
    return scale.reshape(1, c_pad), shift.reshape(1, c_pad)


def basic_block_forward(x_nchw, params, stride=1):
    """Pallas implementation of BasicBlock.forward (NCHW in / NCHW out)."""
    assert stride == 1, "TODO(synk): stride > 1 not implemented in the kernel"

    B, in_planes, H, W = x_nchw.shape
    planes = params["conv1_w"].shape[0]
    has_projection = (stride != 1) or (in_planes != planes)
    if not has_projection:
        assert in_planes == planes

    cin_p = _ceil_to(in_planes, _LANE)
    cp = _ceil_to(planes, _LANE)
    HW = H * W
    count = float(B * HW)

    # NCHW -> NHWC + channel pad, one fused XLA pass at the block boundary.
    x = jnp.transpose(x_nchw, (0, 2, 3, 1)).astype(jnp.float32)
    x = jnp.pad(x, ((0, 0), (0, 0), (0, 0), (0, cin_p - in_planes)))

    w1 = _pack3x3(params["conv1_w"], cin_p, cp)
    w2 = _pack3x3(params["conv2_w"], cp, cp)

    cparams = pltpu.CompilerParams(
        dimension_semantics=("parallel",),        # megacore-shardable on v7x
        vmem_limit_bytes=_vmem_limit_bytes())

    # Shared BlockSpecs: grid over batch; weights/vectors VMEM-resident.
    x_spec = pl.BlockSpec((1, H, W, cin_p), lambda b: (b, 0, 0, 0))
    act_spec = pl.BlockSpec((1, HW, cp), lambda b: (b, 0, 0))
    st_spec = pl.BlockSpec((1, 2, cp), lambda b: (b, 0, 0))
    vec_spec = pl.BlockSpec((1, cp), lambda b: (0, 0))
    w1_spec = pl.BlockSpec(w1.shape, lambda b: (0, 0))
    w2_spec = pl.BlockSpec(w2.shape, lambda b: (0, 0))

    act_shape = jax.ShapeDtypeStruct((B, HW, cp), jnp.float32)
    st_shape = jax.ShapeDtypeStruct((B, 2, cp), jnp.float32)

    # ---- stage 1: conv1 (+ 1x1 projection) + per-image BN partials ---------
    if has_projection:
        wsc = _pack1x1(params["sc_w"], cin_p, cp)
        y1, st1, sc, stsc = pl.pallas_call(
            functools.partial(_stage1_kernel, True),
            grid=(B,),
            in_specs=[x_spec, w1_spec, pl.BlockSpec(wsc.shape, lambda b: (0, 0))],
            out_specs=(act_spec, st_spec, act_spec, st_spec),
            out_shape=(act_shape, st_shape, act_shape, st_shape),
            compiler_params=cparams,
        )(x, w1, wsc)
    else:
        y1, st1 = pl.pallas_call(
            functools.partial(_stage1_kernel, False),
            grid=(B,),
            in_specs=[x_spec, w1_spec],
            out_specs=(act_spec, st_spec),
            out_shape=(act_shape, st_shape),
            compiler_params=cparams,
        )(x, w1)

    # ---- bn1 stats -> fused scale/shift (tiny XLA reduction) ---------------
    s1, sh1 = _bn_scale_shift(st1, params["bn1_g"], params["bn1_b"], count, cp)

    # ---- stage 2: bn1 + relu + conv2 + per-image BN partials ---------------
    y2, st2 = pl.pallas_call(
        functools.partial(_stage2_kernel, H, W),
        grid=(B,),
        in_specs=[act_spec, vec_spec, vec_spec, w2_spec],
        out_specs=(act_spec, st_spec),
        out_shape=(act_shape, st_shape),
        compiler_params=cparams,
    )(y1, s1, sh1, w2)

    # ---- bn2 / shortcut-bn scale & shift ------------------------------------
    s2, sh2 = _bn_scale_shift(st2, params["bn2_g"], params["bn2_b"], count, cp)
    if has_projection:
        ssc, shsc = _bn_scale_shift(stsc, params["sc_g"], params["sc_b"], count, cp)
        z = sc
    else:
        ssc = jnp.ones((1, cp), jnp.float32)
        shsc = jnp.zeros((1, cp), jnp.float32)
        z = x.reshape(B, HW, cin_p)               # identity: cin_p == cp

    # ---- stage 3: bn2 + shortcut + relu -------------------------------------
    out = pl.pallas_call(
        _stage3_kernel,
        grid=(B,),
        in_specs=[act_spec, vec_spec, vec_spec, act_spec, vec_spec, vec_spec],
        out_specs=act_spec,
        out_shape=act_shape,
        compiler_params=cparams,
    )(y2, s2, sh2, z, ssc, shsc)

    out = out[:, :, :planes].reshape(B, H, W, planes)
    return jnp.transpose(out, (0, 3, 1, 2))       # NHWC -> NCHW


# ------------------------- pure-JAX reference ------------------------------
def basic_block_ref(x, params, stride=1):
    def conv(x, w, s, pad):
        return jax.lax.conv_general_dilated(
            x, w, (s, s), ((pad, pad), (pad, pad)),
            dimension_numbers=("NCHW", "OIHW", "NCHW"))

    def bn(y, g, b):
        mean = y.mean(axis=(0, 2, 3), keepdims=True)
        var = ((y - mean) ** 2).mean(axis=(0, 2, 3), keepdims=True)
        return ((y - mean) * jax.lax.rsqrt(var + _EPS)
                * g.reshape(1, -1, 1, 1) + b.reshape(1, -1, 1, 1))

    planes = params["conv1_w"].shape[0]
    out = jax.nn.relu(bn(conv(x, params["conv1_w"], stride, 1),
                         params["bn1_g"], params["bn1_b"]))
    out = bn(conv(out, params["conv2_w"], 1, 1),
             params["bn2_g"], params["bn2_b"])
    if stride != 1 or x.shape[1] != planes:
        sc = bn(conv(x, params["sc_w"], stride, 0),
                params["sc_g"], params["sc_b"])
    else:
        sc = x
    return jax.nn.relu(out + sc)


def init_params(key, in_planes, planes, stride=1):
    ks = jax.random.split(key, 8)
    p = {
        "conv1_w": 0.1 * jax.random.normal(ks[0], (planes, in_planes, 3, 3), jnp.float32),
        "bn1_g": 1.0 + 0.1 * jax.random.normal(ks[1], (planes,), jnp.float32),
        "bn1_b": 0.1 * jax.random.normal(ks[2], (planes,), jnp.float32),
        "conv2_w": 0.1 * jax.random.normal(ks[3], (planes, planes, 3, 3), jnp.float32),
        "bn2_g": 1.0 + 0.1 * jax.random.normal(ks[4], (planes,), jnp.float32),
        "bn2_b": 0.1 * jax.random.normal(ks[5], (planes,), jnp.float32),
    }
    if stride != 1 or in_planes != planes:
        p["sc_w"] = 0.1 * jax.random.normal(ks[6], (planes, in_planes, 1, 1), jnp.float32)
        p["sc_g"] = 1.0 + 0.05 * jax.random.normal(ks[7], (planes,), jnp.float32)
        p["sc_b"] = jnp.zeros((planes,), jnp.float32)
    return p


if __name__ == "__main__":
    key = jax.random.PRNGKey(0)
    k_x1, k_p1, k_x2, k_p2 = jax.random.split(key, 4)

    # Case 1: projection shortcut (in_planes != planes)
    x1 = jax.random.normal(k_x1, (2, 4, 16, 16), jnp.float32)
    p1 = init_params(k_p1, in_planes=4, planes=8, stride=1)
    out1 = jax.block_until_ready(basic_block_forward(x1, p1, stride=1))
    ref1 = basic_block_ref(x1, p1, stride=1)
    assert out1.shape == (2, 8, 16, 16)
    # bf16 MXU operands (f32 accumulation) vs. an f32 reference: tolerance
    # covers the bf16 input-rounding error of the matmul path.
    assert jnp.allclose(out1, ref1, rtol=5e-2, atol=5e-2), "projection-shortcut mismatch"

    # Case 2: identity shortcut (in_planes == planes, stride == 1)
    x2 = jax.random.normal(k_x2, (2, 8, 16, 16), jnp.float32)
    p2 = init_params(k_p2, in_planes=8, planes=8, stride=1)
    out2 = jax.block_until_ready(basic_block_forward(x2, p2, stride=1))
    ref2 = basic_block_ref(x2, p2, stride=1)
    assert out2.shape == (2, 8, 16, 16)
    assert jnp.allclose(out2, ref2, rtol=5e-2, atol=5e-2), "identity-shortcut mismatch"

    print("KERNEL_OK")
</pallas_src>

<mosaic_0001>
module attributes {stable_mosaic.version = 11 : i64} {
  func.func @_stage1_kernel(%arg0: i32, %arg1: memref<1x16x16x128xf32, #tpu.memory_space<vmem>>, %arg2: memref<1152x128xbf16, #tpu.memory_space<vmem>>, %arg3: memref<128x128xbf16, #tpu.memory_space<vmem>>, %arg4: memref<1x256x128xf32, #tpu.memory_space<vmem>>, %arg5: memref<1x2x128xf32, #tpu.memory_space<vmem>>, %arg6: memref<1x256x128xf32, #tpu.memory_space<vmem>>, %arg7: memref<1x2x128xf32, #tpu.memory_space<vmem>>) attributes {dimension_semantics = [#tpu.dimension_semantics<parallel>], iteration_bounds = array<i64: 2>, scalar_prefetch = 0 : i64, scratch_operands = 0 : i64, tpu.core_type = #tpu.core_type<tc>, window_params = [{transform_indices = @transform_0, window_bounds = array<i64: 1, 16, 16, 128>}, {pipeline_mode = #tpu.pipeline_mode<synchronous>, transform_indices = @transform_1, window_bounds = array<i64: 1152, 128>}, {pipeline_mode = #tpu.pipeline_mode<synchronous>, transform_indices = @transform_2, window_bounds = array<i64: 128, 128>}, {transform_indices = @transform_3, window_bounds = array<i64: 1, 256, 128>}, {transform_indices = @transform_4, window_bounds = array<i64: 1, 2, 128>}, {transform_indices = @transform_5, window_bounds = array<i64: 1, 256, 128>}, {transform_indices = @transform_6, window_bounds = array<i64: 1, 2, 128>}]} {
    %c0 = arith.constant 0 : index
    %c0_0 = arith.constant 0 : index
    %c0_1 = arith.constant 0 : index
    %c0_2 = arith.constant 0 : index
    %0 = vector.load %arg1[%c0, %c0_0, %c0_1, %c0_2] : memref<1x16x16x128xf32, #tpu.memory_space<vmem>>, vector<1x16x16x128xf32>
    %1 = vector.shape_cast %0 : vector<1x16x16x128xf32> to vector<16x16x128xf32>
    %2 = arith.truncf %1 : vector<16x16x128xf32> to vector<16x16x128xbf16>
    %cst = arith.constant 0.000000e+00 : bf16
    %3 = vector.broadcast %cst : bf16 to vector<16x1x128xbf16>
    %4 = tpu.concatenate %3, %2, %3 in 1 : vector<16x1x128xbf16>, vector<16x16x128xbf16>, vector<16x1x128xbf16> -> vector<16x18x128xbf16>
    %5 = vector.extract_strided_slice %4 {offsets = [0, 0, 0], sizes = [16, 16, 128], strides = [1, 1, 1]} : vector<16x18x128xbf16> to vector<16x16x128xbf16>
    %6 = vector.extract_strided_slice %4 {offsets = [0, 1, 0], sizes = [16, 16, 128], strides = [1, 1, 1]} : vector<16x18x128xbf16> to vector<16x16x128xbf16>
    %7 = vector.extract_strided_slice %4 {offsets = [0, 2, 0], sizes = [16, 16, 128], strides = [1, 1, 1]} : vector<16x18x128xbf16> to vector<16x16x128xbf16>
    %8 = tpu.concatenate %5, %6, %7 in 2 : vector<16x16x128xbf16>, vector<16x16x128xbf16>, vector<16x16x128xbf16> -> vector<16x16x384xbf16>
    %cst_3 = arith.constant 0.000000e+00 : bf16
    %9 = vector.broadcast %cst_3 : bf16 to vector<1x16x384xbf16>
    %10 = tpu.concatenate %9, %8, %9 in 0 : vector<1x16x384xbf16>, vector<16x16x384xbf16>, vector<1x16x384xbf16> -> vector<18x16x384xbf16>
    %11 = vector.extract_strided_slice %10 {offsets = [0, 0, 0], sizes = [16, 16, 384], strides = [1, 1, 1]} : vector<18x16x384xbf16> to vector<16x16x384xbf16>
    %12 = vector.extract_strided_slice %10 {offsets = [1, 0, 0], sizes = [16, 16, 384], strides = [1, 1, 1]} : vector<18x16x384xbf16> to vector<16x16x384xbf16>
    %13 = vector.extract_strided_slice %10 {offsets = [2, 0, 0], sizes = [16, 16, 384], strides = [1, 1, 1]} : vector<18x16x384xbf16> to vector<16x16x384xbf16>
    %14 = tpu.concatenate %11, %12, %13 in 2 : vector<16x16x384xbf16>, vector<16x16x384xbf16>, vector<16x16x384xbf16> -> vector<16x16x1152xbf16>
    %15 = vector.shape_cast %14 : vector<16x16x1152xbf16> to vector<256x1152xbf16>
    %c0_4 = arith.constant 0 : index
    %c0_5 = arith.constant 0 : index
    %16 = vector.load %arg2[%c0_4, %c0_5] : memref<1152x128xbf16, #tpu.memory_space<vmem>>, vector<1152x128xbf16>
    %cst_6 = arith.constant dense<0.000000e+00> : vector<256x128xf32>
    %17 = tpu.matmul %15, %16, %cst_6 {dimension_numbers = #tpu.dot_dimension_numbers<[1], [0], [0], [1], [0, 0, 1, 1], [], []>} : vector<256x1152xbf16>, vector<1152x128xbf16>, vector<256x128xf32> -> vector<256x128xf32>
    %c0_7 = arith.constant 0 : index
    %c0_8 = arith.constant 0 : index
    %c0_9 = arith.constant 0 : index
    %18 = vector.load %arg4[%c0_7, %c0_8, %c0_9] : memref<1x256x128xf32, #tpu.memory_space<vmem>>, vector<1x256x128xf32>
    %19 = vector.shape_cast %18 : vector<1x256x128xf32> to vector<256x128xf32>
    %20 = vector.shape_cast %17 : vector<256x128xf32> to vector<1x256x128xf32>
    tpu.vector_store %arg4[%c0_7, %c0_8, %c0_9], %20 {strides = array<i32>} : memref<1x256x128xf32, #tpu.memory_space<vmem>>, vector<1x256x128xf32>,
    %cst_10 = arith.constant 0.000000e+00 : f32
    %21 = vector.broadcast %cst_10 : f32 to vector<1x128xf32>
    %cst_11 = arith.constant 0.000000e+00 : f32
    %22 = vector.broadcast %cst_11 : f32 to vector<1x128xf32>
    %cst_12 = arith.constant dense<0.000000e+00> : vector<128xf32>
    %23 = vector.multi_reduction <add>, %17, %cst_12 [0] : vector<256x128xf32> to vector<128xf32>
    %24 = vector.shape_cast %23 : vector<128xf32> to vector<1x128xf32>
    %25 = arith.addf %21, %24 : vector<1x128xf32>
    %26 = arith.mulf %17, %17 : vector<256x128xf32>
    %cst_13 = arith.constant dense<0.000000e+00> : vector<128xf32>
    %27 = vector.multi_reduction <add>, %26, %cst_13 [0] : vector<256x128xf32> to vector<128xf32>
    %28 = vector.shape_cast %27 : vector<128xf32> to vector<1x128xf32>
    %29 = arith.addf %22, %28 : vector<1x128xf32>
    %30 = tpu.concatenate %25, %29 in 0 : vector<1x128xf32>, vector<1x128xf32> -> vector<2x128xf32>
    %c0_14 = arith.constant 0 : index
    %c0_15 = arith.constant 0 : index
    %c0_16 = arith.constant 0 : index
    %31 = vector.load %arg5[%c0_14, %c0_15, %c0_16] : memref<1x2x128xf32, #tpu.memory_space<vmem>>, vector<1x2x128xf32>
    %32 = vector.shape_cast %31 : vector<1x2x128xf32> to vector<2x128xf32>
    %33 = vector.shape_cast %30 : vector<2x128xf32> to vector<1x2x128xf32>
    tpu.vector_store %arg5[%c0_14, %c0_15, %c0_16], %33 {strides = array<i32>} : memref<1x2x128xf32, #tpu.memory_space<vmem>>, vector<1x2x128xf32>,
    %34 = vector.shape_cast %2 : vector<16x16x128xbf16> to vector<256x128xbf16>
    %c0_17 = arith.constant 0 : index
    %c0_18 = arith.constant 0 : index
    %35 = vector.load %arg3[%c0_17, %c0_18] : memref<128x128xbf16, #tpu.memory_space<vmem>>, vector<128x128xbf16>
    %cst_19 = arith.constant dense<0.000000e+00> : vector<256x128xf32>
    %36 = tpu.matmul %34, %35, %cst_19 {dimension_numbers = #tpu.dot_dimension_numbers<[1], [0], [0], [1], [0, 0, 1, 1], [], []>} : vector<256x128xbf16>, vector<128x128xbf16>, vector<256x128xf32> -> vector<256x128xf32>
    %c0_20 = arith.constant 0 : index
    %c0_21 = arith.constant 0 : index
    %c0_22 = arith.constant 0 : index
    %37 = vector.load %arg6[%c0_20, %c0_21, %c0_22] : memref<1x256x128xf32, #tpu.memory_space<vmem>>, vector<1x256x128xf32>
    %38 = vector.shape_cast %37 : vector<1x256x128xf32> to vector<256x128xf32>
    %39 = vector.shape_cast %36 : vector<256x128xf32> to vector<1x256x128xf32>
    tpu.vector_store %arg6[%c0_20, %c0_21, %c0_22], %39 {strides = array<i32>} : memref<1x256x128xf32, #tpu.memory_space<vmem>>, vector<1x256x128xf32>,
    %cst_23 = arith.constant 0.000000e+00 : f32
    %40 = vector.broadcast %cst_23 : f32 to vector<1x128xf32>
    %cst_24 = arith.constant 0.000000e+00 : f32
    %41 = vector.broadcast %cst_24 : f32 to vector<1x128xf32>
    %cst_25 = arith.constant dense<0.000000e+00> : vector<128xf32>
    %42 = vector.multi_reduction <add>, %36, %cst_25 [0] : vector<256x128xf32> to vector<128xf32>
    %43 = vector.shape_cast %42 : vector<128xf32> to vector<1x128xf32>
    %44 = arith.addf %40, %43 : vector<1x128xf32>
    %45 = arith.mulf %36, %36 : vector<256x128xf32>
    %cst_26 = arith.constant dense<0.000000e+00> : vector<128xf32>
    %46 = vector.multi_reduction <add>, %45, %cst_26 [0] : vector<256x128xf32> to vector<128xf32>
    %47 = vector.shape_cast %46 : vector<128xf32> to vector<1x128xf32>
    %48 = arith.addf %41, %47 : vector<1x128xf32>
    %49 = tpu.concatenate %44, %48 in 0 : vector<1x128xf32>, vector<1x128xf32> -> vector<2x128xf32>
    %c0_27 = arith.constant 0 : index
    %c0_28 = arith.constant 0 : index
    %c0_29 = arith.constant 0 : index
    %50 = vector.load %arg7[%c0_27, %c0_28, %c0_29] : memref<1x2x128xf32, #tpu.memory_space<vmem>>, vector<1x2x128xf32>
    %51 = vector.shape_cast %50 : vector<1x2x128xf32> to vector<2x128xf32>
    %52 = vector.shape_cast %49 : vector<2x128xf32> to vector<1x2x128xf32>
    tpu.vector_store %arg7[%c0_27, %c0_28, %c0_29], %52 {strides = array<i32>} : memref<1x2x128xf32, #tpu.memory_space<vmem>>, vector<1x2x128xf32>,
    return
  }
  func.func @transform_0(%arg0: i32) -> (i32, i32, i32, i32) {
    %c0_i32 = arith.constant 0 : i32
    %c0_i32_0 = arith.constant 0 : i32
    %c0_i32_1 = arith.constant 0 : i32
    %c0_i32_2 = arith.constant 0 : i32
    return %arg0, %c0_i32, %c0_i32_0, %c0_i32_1 : i32, i32, i32, i32
  }
  func.func @transform_1(%arg0: i32) -> (i32, i32) {
    %c0_i32 = arith.constant 0 : i32
    %c0_i32_0 = arith.constant 0 : i32
    %c0_i32_1 = arith.constant 0 : i32
    return %c0_i32, %c0_i32_0 : i32, i32
  }
  func.func @transform_2(%arg0: i32) -> (i32, i32) {
    %c0_i32 = arith.constant 0 : i32
    %c0_i32_0 = arith.constant 0 : i32
    %c0_i32_1 = arith.constant 0 : i32
    return %c0_i32, %c0_i32_0 : i32, i32
  }
  func.func @transform_3(%arg0: i32) -> (i32, i32, i32) {
    %c0_i32 = arith.constant 0 : i32
    %c0_i32_0 = arith.constant 0 : i32
    %c0_i32_1 = arith.constant 0 : i32
    return %arg0, %c0_i32, %c0_i32_0 : i32, i32, i32
  }
  func.func @transform_4(%arg0: i32) -> (i32, i32, i32) {
    %c0_i32 = arith.constant 0 : i32
    %c0_i32_0 = arith.constant 0 : i32
    %c0_i32_1 = arith.constant 0 : i32
    return %arg0, %c0_i32, %c0_i32_0 : i32, i32, i32
  }
  func.func @transform_5(%arg0: i32) -> (i32, i32, i32) {
    %c0_i32 = arith.constant 0 : i32
    %c0_i32_0 = arith.constant 0 : i32
    %c0_i32_1 = arith.constant 0 : i32
    return %arg0, %c0_i32, %c0_i32_0 : i32, i32, i32
  }
  func.func @transform_6(%arg0: i32) -> (i32, i32, i32) {
    %c0_i32 = arith.constant 0 : i32
    %c0_i32_0 = arith.constant 0 : i32
    %c0_i32_1 = arith.constant 0 : i32
    return %arg0, %c0_i32, %c0_i32_0 : i32, i32, i32
  }
}

</mosaic_0001>

<llo_original>
// kernel: tpu_custom_call.1
$region0: #{tpu_custom_call.1}
  #allocation0 [shape = 'u32[]', space=smem, size = 0x4, offset = 0x4, fixed_abs, tag = 'smem constant byte address 0x4 - core index']
  #allocation1 [shape = 'u32[144,128]{1,0:T(1,128)}', space=vmem, size = 0x12000, scoped, tag = 'internal scratch']
  %s0 = inlined_call_operand.hbm [shape: f32[2,16,16,128], index: 0, kind: input, shape index: {}]
  %s1 = inlined_call_operand.hbm [shape: bf16[1152,128], index: 1, kind: input, shape index: {}]
  %s2 = inlined_call_operand.hbm [shape: bf16[128,128], index: 2, kind: input, shape index: {}]
  %s3 = inlined_call_operand.hbm [shape: f32[2,256,128], index: 3, kind: output, shape index: {0}]
  %s4 = inlined_call_operand.hbm [shape: f32[2,2,128], index: 4, kind: output, shape index: {1}]
  %s5 = inlined_call_operand.hbm [shape: f32[2,256,128], index: 5, kind: output, shape index: {2}]
  %s6 = inlined_call_operand.hbm [shape: f32[2,2,128], index: 6, kind: output, shape index: {3}]
  %7 = xla_tuple %s3, %s4, %s5, %s6
  %s8 = sld [smem:[#allocation0]]
  $region81: #{tpu_custom_call.1} parent=0
    _
  %s10 = ssub.s32 1, %s8
  %s11 = scalar_select 0, %s10, %s8
  $region1: #{tpu_custom_call.1} parent=0
    #allocation2 [shape = 'u8[262144]{0}', space=vmem, size = 0x40000, scoped, tag = 'input window, operand 0']
    #allocation3 [shape = 's32[2]{0}', space=sflag, size = 0x8, scoped, tag = 'scoped memory for tpu_custom_call.1']
    #allocation4 [shape = 's32[2]{0}', space=sflag, size = 0x8, scoped, tag = 'scoped memory for tpu_custom_call.1']
    #allocation5 [shape = 'u8[294912]{0}', space=vmem, size = 0x48000, scoped, tag = 'input window, operand 1, single buffered']
    #allocation6 [shape = 's32[1]{0}', space=sflag, size = 0x4, scoped, tag = 'scoped memory for tpu_custom_call.1']
    #allocation7 [shape = 'u8[32768]{0}', space=vmem, size = 0x8000, scoped, tag = 'input window, operand 2, single buffered']
    #allocation8 [shape = 'u8[262144]{0}', space=vmem, size = 0x40000, scoped, tag = 'output window, operand 0']
    #allocation9 [shape = 'u8[2048]{0}', space=vmem, size = 0x800, scoped, tag = 'output window, operand 1']
    #allocation10 [shape = 's32[2]{0}', space=sflag, size = 0x8, scoped, tag = 'scoped memory for tpu_custom_call.1']
    #allocation11 [shape = 'u8[262144]{0}', space=vmem, size = 0x40000, scoped, tag = 'output window, operand 2']
    #allocation12 [shape = 'u8[2048]{0}', space=vmem, size = 0x800, scoped, tag = 'output window, operand 3']
    #allocation13 [shape = 's32[2]{0}', space=sflag, size = 0x8, scoped, tag = 'scoped memory for tpu_custom_call.1']
    %12 = vsyncpa [#allocation3], 0
    %s13 = scalar_lea.sflag [#allocation3], 1
    %14 = vsyncpa %s13, 0
    %15 = vsyncpa [#allocation6], 0
    %16 = vsyncpa [#allocation4], 0
    %s17 = scalar_lea.sflag [#allocation4], 1
    %18 = vsyncpa %s17, 0
    %19 = vsyncpa [#allocation10], 0
    %s20 = scalar_lea.sflag [#allocation10], 1
    %21 = vsyncpa %s20, 0
    %22 = vsyncpa [#allocation13], 0
    %s23 = scalar_lea.sflag [#allocation13], 1
    %24 = vsyncpa %s23, 0
    loop: start=0, step=1, limit=4
    $region2: #{tpu_custom_call.1} parent=1 // loop_pre_header
      _
    $region3: #{tpu_custom_call.1} parent=1 // loop_header
      %s26 = sphi 0, %s30
      %p27 = scmp.ge.s32.totalorder %s26, 4
      %s36 = sphi 0, %s38
      %s39 = sphi 0, %s36
      %s40 = sphi 0, %s39
      %s56 = sphi 0, %s40
      %s60 = sphi 0, %s60
      %s62 = sphi 0, %s60
      %s63 = sphi 0, %s62
      %s77 = sphi 0, %s63
      %s81 = sphi 0, %s81
      %s83 = sphi 0, %s81
      %s84 = sphi 0, %s83
      %s98 = sphi 0, %s84
      %s104 = sphi 0, %s106
      %s107 = sphi 0, %s104
      %s108 = sphi 0, %s107
      %s124 = sphi 0, %s108
      %s130 = sphi 0, %s132
      %s133 = sphi 0, %s130
      %s134 = sphi 0, %s133
      %s150 = sphi 0, %s134
      %s156 = sphi 0, %s158
      %s159 = sphi 0, %s156
      %s160 = sphi 0, %s159
      %s176 = sphi 0, %s160
      %s182 = sphi 0, %s184
      %s185 = sphi 0, %s182
      %s186 = sphi 0, %s185
      %s202 = sphi 0, %s186
    $region4: #{tpu_custom_call.1} parent=1 // loop_header_branch
      %29 = sbr.rel (%p27) target = $region8
    $region5: #{tpu_custom_call.1} parent=1 // loop_body
      %s31 = ssub.s32 %s26, 1
      %s32 = ssub.s32 %s26, 2
      %s33 = sadd.s32 %s26, 1
      %s34 = ssub.s32 %s26, %s33
      %p35 = scmp.eq.s32.totalorder %s34, 0
      %s37 = sadd.s32 %s36, 1
      %s38 = scalar_select %p35, %s36, %s37
      %p41 = pneg %p35
      %p42 = scmp.eq.s32.totalorder %s26, 1
      %p43 = por %p41, %p42
      %p44 = scmp.ne.s32.totalorder %s36, %s39
      %p45 = scmp.eq.s32.totalorder %s26, 0
      %p46 = por %p44, %p45
      %p47 = scmp.ne.s32.totalorder %s36, %s39
      %p48 = scmp.eq.s32.totalorder %s31, 1
      %p49 = por %p47, %p48
      %p50 = scmp.ne.s32.totalorder %s39, %s40
      %p51 = scmp.eq.s32.totalorder %s31, 0
      %p52 = por %p50, %p51
      %p53 = scmp.ne.s32.totalorder %s39, %s40
      %p54 = scmp.eq.s32.totalorder %s32, 1
      %p55 = por %p53, %p54
      %p57 = scmp.ne.s32.totalorder %s40, %s56
      %p58 = scmp.eq.s32.totalorder %s32, 0
      %p59 = por %p57, %p58
      %s61 = sadd.s32 %s60, 1
      %p64 = scmp.eq.s32.totalorder %s26, 1
      %p65 = scmp.ne.s32.totalorder %s60, %s62
      %p66 = scmp.eq.s32.totalorder %s26, 0
      %p67 = por %p65, %p66
      %p68 = scmp.ne.s32.totalorder %s60, %s62
      %p69 = scmp.eq.s32.totalorder %s31, 1
      %p70 = por %p68, %p69
      %p71 = scmp.ne.s32.totalorder %s62, %s63
      %p72 = scmp.eq.s32.totalorder %s31, 0
      %p73 = por %p71, %p72
      %p74 = scmp.ne.s32.totalorder %s62, %s63
      %p75 = scmp.eq.s32.totalorder %s32, 1
      %p76 = por %p74, %p75
      %p78 = scmp.ne.s32.totalorder %s63, %s77
      %p79 = scmp.eq.s32.totalorder %s32, 0
      %p80 = por %p78, %p79
      %s82 = sadd.s32 %s81, 1
      %p85 = scmp.eq.s32.totalorder %s26, 1
      %p86 = scmp.ne.s32.totalorder %s81, %s83
      %p87 = scmp.eq.s32.totalorder %s26, 0
      %p88 = por %p86, %p87
      %p89 = scmp.ne.s32.totalorder %s81, %s83
      %p90 = scmp.eq.s32.totalorder %s31, 1
      %p91 = por %p89, %p90
      %p92 = scmp.ne.s32.totalorder %s83, %s84
      %p93 = scmp.eq.s32.totalorder %s31, 0
      %p94 = por %p92, %p93
      %p95 = scmp.ne.s32.totalorder %s83, %s84
      %p96 = scmp.eq.s32.totalorder %s32, 1
      %p97 = por %p95, %p96
      %p99 = scmp.ne.s32.totalorder %s84, %s98
      %p100 = scmp.eq.s32.totalorder %s32, 0
      %p101 = por %p99, %p100
      %s102 = ssub.s32 %s26, %s33
      %p103 = scmp.eq.s32.totalorder %s102, 0
      %s105 = sadd.s32 %s104, 1
      %s106 = scalar_select %p103, %s104, %s105
      %p109 = pneg %p103
      %p110 = scmp.eq.s32.totalorder %s26, 1
      %p111 = por %p109, %p110
      %p112 = scmp.ne.s32.totalorder %s104, %s107
      %p113 = scmp.eq.s32.totalorder %s26, 0
      %p114 = por %p112, %p113
      %p115 = scmp.ne.s32.totalorder %s104, %s107
      %p116 = scmp.eq.s32.totalorder %s31, 1
      %p117 = por %p115, %p116
      %p118 = scmp.ne.s32.totalorder %s107, %s108
      %p119 = scmp.eq.s32.totalorder %s31, 0
      %p120 = por %p118, %p119
      %p121 = scmp.ne.s32.totalorder %s107, %s108
      %p122 = scmp.eq.s32.totalorder %s32, 1
      %p123 = por %p121, %p122
      %p125 = scmp.ne.s32.totalorder %s108, %s124
      %p126 = scmp.eq.s32.totalorder %s32, 0
      %p127 = por %p125, %p126
      %s128 = ssub.s32 %s26, %s33
      %p129 = scmp.eq.s32.totalorder %s128, 0
      %s131 = sadd.s32 %s130, 1
      %s132 = scalar_select %p129, %s130, %s131
      %p135 = pneg %p129
      %p136 = scmp.eq.s32.totalorder %s26, 1
      %p137 = por %p135, %p136
      %p138 = scmp.ne.s32.totalorder %s130, %s133
      %p139 = scmp.eq.s32.totalorder %s26, 0
      %p140 = por %p138, %p139
      %p141 = scmp.ne.s32.totalorder %s130, %s133
      %p142 = scmp.eq.s32.totalorder %s31, 1
      %p143 = por %p141, %p142
      %p144 = scmp.ne.s32.totalorder %s133, %s134
      %p145 = scmp.eq.s32.totalorder %s31, 0
      %p146 = por %p144, %p145
      %p147 = scmp.ne.s32.totalorder %s133, %s134
      %p148 = scmp.eq.s32.totalorder %s32, 1
      %p149 = por %p147, %p148
      %p151 = scmp.ne.s32.totalorder %s134, %s150
      %p152 = scmp.eq.s32.totalorder %s32, 0
      %p153 = por %p151, %p152
      %s154 = ssub.s32 %s26, %s33
      %p155 = scmp.eq.s32.totalorder %s154, 0
      %s157 = sadd.s32 %s156, 1
      %s158 = scalar_select %p155, %s156, %s157
      %p161 = pneg %p155
      %p162 = scmp.eq.s32.totalorder %s26, 1
      %p163 = por %p161, %p162
      %p164 = scmp.ne.s32.totalorder %s156, %s159
      %p165 = scmp.eq.s32.totalorder %s26, 0
      %p166 = por %p164, %p165
      %p167 = scmp.ne.s32.totalorder %s156, %s159
      %p168 = scmp.eq.s32.totalorder %s31, 1
      %p169 = por %p167, %p168
      %p170 = scmp.ne.s32.totalorder %s159, %s160
      %p171 = scmp.eq.s32.totalorder %s31, 0
      %p172 = por %p170, %p171
      %p173 = scmp.ne.s32.totalorder %s159, %s160
      %p174 = scmp.eq.s32.totalorder %s32, 1
      %p175 = por %p173, %p174
      %p177 = scmp.ne.s32.totalorder %s160, %s176
      %p178 = scmp.eq.s32.totalorder %s32, 0
      %p179 = por %p177, %p178
      %s180 = ssub.s32 %s26, %s33
      %p181 = scmp.eq.s32.totalorder %s180, 0
      %s183 = sadd.s32 %s182, 1
      %s184 = scalar_select %p181, %s182, %s183
      %p187 = pneg %p181
      %p188 = scmp.eq.s32.totalorder %s26, 1
      %p189 = por %p187, %p188
      %p190 = scmp.ne.s32.totalorder %s182, %s185
      %p191 = scmp.eq.s32.totalorder %s26, 0
      %p192 = por %p190, %p191
      %p193 = scmp.ne.s32.totalorder %s182, %s185
      %p194 = scmp.eq.s32.totalorder %s31, 1
      %p195 = por %p193, %p194
      %p196 = scmp.ne.s32.totalorder %s185, %s186
      %p197 = scmp.eq.s32.totalorder %s31, 0
      %p198 = por %p196, %p197
      %p199 = scmp.ne.s32.totalorder %s185, %s186
      %p200 = scmp.eq.s32.totalorder %s32, 1
      %p201 = por %p199, %p200
      %p203 = scmp.ne.s32.totalorder %s186, %s202
      %p204 = scmp.eq.s32.totalorder %s32, 0
      %p205 = por %p203, %p204
      %p206 = scmp.le.s32.totalorder 1, %s26
      %p207 = scmp.lt.s32.totalorder %s26, 3
      %p208 = pnand %p206, %p207
      %p209 = pneg %p208
      // Predicated region
      $region9: #{tpu_custom_call.1} parent=5 // pred_check
        _
      $region10: #{tpu_custom_call.1} parent=5 // pred_check_branch
        %211 = sbr.rel (%p208) target = $region12
      $region11: #{tpu_custom_call.1} parent=5 // pred_region
        %s212 = ssub.s32 %s26, 1
        // Predicated region
        $region13: #{tpu_custom_call.1} parent=11 // pred_check
          %p213 = pneg %p73
        $region14: #{tpu_custom_call.1} parent=11 // pred_check_branch
          %215 = sbr.rel (%p213) target = $region16
        $region15: #{tpu_custom_call.1} parent=11 // pred_region
          %s217 = ssub.s32 9216, 9216
          %218 = vsyncadd [#allocation6], %s217
          %s219 = sshll.u32 [#allocation5], 4
          %s220 = int_to_ptr.vmem [resolvable:$true] %s219
          %225 = dma.hbm_to_vmem [thread:$0]  %s1, 9216, %s220, [#allocation6], 64, 64, 4
        $region16: #{tpu_custom_call.1} parent=11 // pred_fallthru
          _
        // Predicated region
        $region17: #{tpu_custom_call.1} parent=11 // pred_check
          %p226 = pneg %p94
        $region18: #{tpu_custom_call.1} parent=11 // pred_check_branch
          %228 = sbr.rel (%p226) target = $region20
        $region19: #{tpu_custom_call.1} parent=11 // pred_region
          %s230 = ssub.s32 1024, 1024
          %231 = vsyncadd [#allocation6], %s230
          %s232 = sshll.u32 [#allocation7], 4
          %s233 = int_to_ptr.vmem [resolvable:$true] %s232
          %238 = dma.hbm_to_vmem [thread:$0]  %s2, 1024, %s233, [#allocation6], 64, 64, 4
        $region20: #{tpu_custom_call.1} parent=11 // pred_fallthru
          _
      $region12: #{tpu_custom_call.1} parent=5 // pred_fallthru
        _
      %p239 = scmp.lt.s32.totalorder %s26, 2
      // Predicated region
      $region21: #{tpu_custom_call.1} parent=5 // pred_check
        %p240 = pneg %p239
      $region22: #{tpu_custom_call.1} parent=5 // pred_check_branch
        %242 = sbr.rel (%p240) target = $region24
      $region23: #{tpu_custom_call.1} parent=5 // pred_region
        // Predicated region
        $region25: #{tpu_custom_call.1} parent=23 // pred_check
          %p243 = pneg %p46
        $region26: #{tpu_custom_call.1} parent=23 // pred_check_branch
          %245 = sbr.rel (%p243) target = $region28
        $region27: #{tpu_custom_call.1} parent=23 // pred_region
          %s246 = sand.u32 %s36, 1
          %s247 = scalar_lea.sflag [#allocation3], %s246
          %s248 = sand.u32 %s36, 1
          %s249 = smul.addr %s248, 256
          %s250 = scalar_lea.vmem [#allocation2], %s249
          %s252 = ssub.s32 4096, 4096
          %253 = vsyncadd %s247, %s252
          %s254 = smul.addr %s26, 32
          %s255 = smul.addr %s254, 128
          %s256 = scalar_lea.hbm %s0, %s255
          %s257 = sshll.u32 %s250, 4
          %s258 = int_to_ptr.vmem [resolvable:$true] %s257
          %263 = dma.hbm_to_vmem [thread:$0]  %s256, 4096, %s258, %s247, 128, 128, 8
        $region28: #{tpu_custom_call.1} parent=23 // pred_fallthru
          _
      $region24: #{tpu_custom_call.1} parent=5 // pred_fallthru
        _
      %p264 = scmp.le.s32.totalorder 1, %s26
      %p265 = scmp.lt.s32.totalorder %s26, 3
      %p266 = pnand %p264, %p265
      %p267 = pneg %p266
      // Predicated region
      $region29: #{tpu_custom_call.1} parent=5 // pred_check
        _
      $region30: #{tpu_custom_call.1} parent=5 // pred_check_branch
        %269 = sbr.rel (%p266) target = $region32
      $region31: #{tpu_custom_call.1} parent=5 // pred_region
        %s270 = ssub.s32 %s26, 1
        %s271 = sand.u32 %s39, 1
        %s272 = scalar_lea.sflag [#allocation3], %s271
        %s273 = sand.u32 %s39, 1
        %s274 = smul.addr %s273, 256
        %s275 = scalar_lea.vmem [#allocation2], %s274
        // Predicated region
        $region33: #{tpu_custom_call.1} parent=31 // pred_check
          %p276 = pneg %p52
        $region34: #{tpu_custom_call.1} parent=31 // pred_check_branch
          %278 = sbr.rel (%p276) target = $region36
        $region35: #{tpu_custom_call.1} parent=31 // pred_region
          %279 = dma.done %s272, 4096
        $region36: #{tpu_custom_call.1} parent=31 // pred_fallthru
          _
        // Predicated region
        $region37: #{tpu_custom_call.1} parent=31 // pred_check
          %p280 = pneg %p73
        $region38: #{tpu_custom_call.1} parent=31 // pred_check_branch
          %282 = sbr.rel (%p280) target = $region40
        $region39: #{tpu_custom_call.1} parent=31 // pred_region
          %283 = dma.done [#allocation6], 9216
        $region40: #{tpu_custom_call.1} parent=31 // pred_fallthru
          _
        // Predicated region
        $region41: #{tpu_custom_call.1} parent=31 // pred_check
          %p284 = pneg %p94
        $region42: #{tpu_custom_call.1} parent=31 // pred_check_branch
          %286 = sbr.rel (%p284) target = $region44
        $region43: #{tpu_custom_call.1} parent=31 // pred_region
          %287 = dma.done [#allocation6], 1024
        $region44: #{tpu_custom_call.1} parent=31 // pred_fallthru
          _
        %s288 = sand.u32 %s39, 1
        %s289 = scalar_lea.sflag [#allocation3], %s288
        %s290 = sand.u32 %s39, 1
        %s291 = smul.addr %s290, 256
        %s292 = scalar_lea.vmem [#allocation2], %s291
        %p293 = pneg %p52
        %p294 = pneg %p49
        %p295 = pneg %p73
        %p296 = pneg %p70
        %p297 = pneg %p94
        %p298 = pneg %p91
        %p299 = pneg %p120
        %p300 = pneg %p117
        %s301 = sand.u32 %s107, 1
        %s302 = scalar_lea.sflag [#allocation4], %s301
        %s303 = sand.u32 %s107, 1
        %s304 = smul.addr %s303, 256
        %s305 = scalar_lea.vmem [#allocation8], %s304
        %p306 = pneg %p146
        %p307 = pneg %p143
        %s308 = sand.u32 %s31, 1
        %s309 = scalar_lea.sflag [#allocation10], %s308
        %s310 = sand.u32 %s133, 1
        %s311 = smul.addr %s310, 2
        %s312 = scalar_lea.vmem [#allocation9], %s311
        %p313 = pneg %p172
        %p314 = pneg %p169
        %s315 = sand.u32 %s31, 1
        %s316 = scalar_lea.sflag [#allocation10], %s315
        %s317 = sand.u32 %s159, 1
        %s318 = smul.addr %s317, 256
        %s319 = scalar_lea.vmem [#allocation11], %s318
        %p320 = pneg %p198
        %p321 = pneg %p195
        %s322 = sand.u32 %s185, 1
        %s323 = scalar_lea.sflag [#allocation13], %s322
        %s324 = sand.u32 %s185, 1
        %s325 = smul.addr %s324, 2
        %s326 = scalar_lea.vmem [#allocation12], %s325
        %v328 = vld [vmem:[%s275] sm:$0xff]
        %v329 = vld [vmem:[%s275 + $0x8] sm:$0xff]
        %v330 = vld [vmem:[%s275 + $0x10] sm:$0xff]
        %v331 = vld [vmem:[%s275 + $0x18] sm:$0xff]
        %v332 = vld [vmem:[%s275 + $0x20] sm:$0xff]
        %v333 = vld [vmem:[%s275 + $0x28] sm:$0xff]
        %v334 = vld [vmem:[%s275 + $0x30] sm:$0xff]
        %v335 = vld [vmem:[%s275 + $0x38] sm:$0xff]
        %v336 = vld [vmem:[%s275 + $0x40] sm:$0xff]
        %v337 = vld [vmem:[%s275 + $0x48] sm:$0xff]
        %v338 = vld [vmem:[%s275 + $0x50] sm:$0xff]
        %v339 = vld [vmem:[%s275 + $0x58] sm:$0xff]
        %v340 = vld [vmem:[%s275 + $0x60] sm:$0xff]
        %v341 = vld [vmem:[%s275 + $0x68] sm:$0xff]
        %v342 = vld [vmem:[%s275 + $0x70] sm:$0xff]
        %v343 = vld [vmem:[%s275 + $0x78] sm:$0xff]
        %v344 = vld [vmem:[%s275 + $0x80] sm:$0xff]
        %v345 = vld [vmem:[%s275 + $0x88] sm:$0xff]
        %v346 = vld [vmem:[%s275 + $0x90] sm:$0xff]
        %v347 = vld [vmem:[%s275 + $0x98] sm:$0xff]
        %v348 = vld [vmem:[%s275 + $0xa0] sm:$0xff]
        %v349 = vld [vmem:[%s275 + $0xa8] sm:$0xff]
        %v350 = vld [vmem:[%s275 + $0xb0] sm:$0xff]
        %v351 = vld [vmem:[%s275 + $0xb8] sm:$0xff]
        %v352 = vld [vmem:[%s275 + $0xc0] sm:$0xff]
        %v353 = vld [vmem:[%s275 + $0xc8] sm:$0xff]
        %v354 = vld [vmem:[%s275 + $0xd0] sm:$0xff]
        %v355 = vld [vmem:[%s275 + $0xd8] sm:$0xff]
        %v356 = vld [vmem:[%s275 + $0xe0] sm:$0xff]
        %v357 = vld [vmem:[%s275 + $0xe8] sm:$0xff]
        %v358 = vld [vmem:[%s275 + $0xf0] sm:$0xff]
        %v359 = vld [vmem:[%s275 + $0xf8] sm:$0xff]
        %v360 = vpack.c.bf16 %v329, %v328
        %v361 = vpack.c.bf16 %v331, %v330
        %v362 = vpack.c.bf16 %v333, %v332
        %v363 = vpack.c.bf16 %v335, %v334
        %v364 = vpack.c.bf16 %v337, %v336
        %v365 = vpack.c.bf16 %v339, %v338
        %v366 = vpack.c.bf16 %v341, %v340
        %v367 = vpack.c.bf16 %v343, %v342
        %v368 = vpack.c.bf16 %v345, %v344
        %v369 = vpack.c.bf16 %v347, %v346
        %v370 = vpack.c.bf16 %v349, %v348
        %v371 = vpack.c.bf16 %v351, %v350
        %v372 = vpack.c.bf16 %v353, %v352
        %v373 = vpack.c.bf16 %v355, %v354
        %v374 = vpack.c.bf16 %v357, %v356
        %v375 = vpack.c.bf16 %v359, %v358
        %v377 = vshrl.u32 %v360, 16
        %v379 = vrot.slane %v377, 7
        %v380 = vshll.u32 %v360, 16
        %v382 = vor.u32 %v379, %v380
        %v384 = vshrl.u32 %v361, 16
        %v386 = vrot.slane %v384, 7
        %v387 = vshll.u32 %v361, 16
        %v389 = vor.u32 %v386, %v387
        %v391 = vshrl.u32 %v362, 16
        %v393 = vrot.slane %v391, 7
        %v394 = vshll.u32 %v362, 16
        %v396 = vor.u32 %v393, %v394
        %v398 = vshrl.u32 %v363, 16
        %v400 = vrot.slane %v398, 7
        %v401 = vshll.u32 %v363, 16
        %v403 = vor.u32 %v400, %v401
        %v405 = vshrl.u32 %v364, 16
        %v407 = vrot.slane %v405, 7
        %v408 = vshll.u32 %v364, 16
        %v410 = vor.u32 %v407, %v408
        %v412 = vshrl.u32 %v365, 16
        %v414 = vrot.slane %v412, 7
        %v415 = vshll.u32 %v365, 16
        %v417 = vor.u32 %v414, %v415
        %v419 = vshrl.u32 %v366, 16
        %v421 = vrot.slane %v419, 7
        %v422 = vshll.u32 %v366, 16
        %v424 = vor.u32 %v421, %v422
        %v426 = vshrl.u32 %v367, 16
        %v428 = vrot.slane %v426, 7
        %v429 = vshll.u32 %v367, 16
        %v431 = vor.u32 %v428, %v429
        %v433 = vshrl.u32 %v368, 16
        %v435 = vrot.slane %v433, 7
        %v436 = vshll.u32 %v368, 16
        %v438 = vor.u32 %v435, %v436
        %v440 = vshrl.u32 %v369, 16
        %v442 = vrot.slane %v440, 7
        %v443 = vshll.u32 %v369, 16
        %v445 = vor.u32 %v442, %v443
        %v447 = vshrl.u32 %v370, 16
        %v449 = vrot.slane %v447, 7
        %v450 = vshll.u32 %v370, 16
        %v452 = vor.u32 %v449, %v450
        %v454 = vshrl.u32 %v371, 16
        %v456 = vrot.slane %v454, 7
        %v457 = vshll.u32 %v371, 16
        %v459 = vor.u32 %v456, %v457
        %v461 = vshrl.u32 %v372, 16
        %v463 = vrot.slane %v461, 7
        %v464 = vshll.u32 %v372, 16
        %v466 = vor.u32 %v463, %v464
        %v468 = vshrl.u32 %v373, 16
        %v470 = vrot.slane %v468, 7
        %v471 = vshll.u32 %v373, 16
        %v473 = vor.u32 %v470, %v471
        %v475 = vshrl.u32 %v374, 16
        %v477 = vrot.slane %v475, 7
        %v478 = vshll.u32 %v374, 16
        %v480 = vor.u32 %v477, %v478
        %v482 = vshrl.u32 %v375, 16
        %v484 = vrot.slane %v482, 7
        %v485 = vshll.u32 %v375, 16
        %v487 = vor.u32 %v484, %v485
        %vm520 = vcmask 1040384
        %vm521 = vsmask.f32 256
        %vm522 = vmand %vm520, %vm521
        %v523 = vsel %vm522, 0, %v382
        %v524 = vsel %vm522, 0, %v389
        %v525 = vsel %vm522, 0, %v396
        %v526 = vsel %vm522, 0, %v403
        %v527 = vsel %vm522, 0, %v410
        %v528 = vsel %vm522, 0, %v417
        %v529 = vsel %vm522, 0, %v424
        %v530 = vsel %vm522, 0, %v431
        %v531 = vsel %vm522, 0, %v438
        %v532 = vsel %vm522, 0, %v445
        %v533 = vsel %vm522, 0, %v452
        %v534 = vsel %vm522, 0, %v459
        %v535 = vsel %vm522, 0, %v466
        %v536 = vsel %vm522, 0, %v473
        %v537 = vsel %vm522, 0, %v480
        %v538 = vsel %vm522, 0, %v487
        %v539 = vsel %vm522, %v379, 0
        %v540 = vsel %vm522, %v386, 0
        %v541 = vsel %vm522, %v393, 0
        %v542 = vsel %vm522, %v400, 0
        %v543 = vsel %vm522, %v407, 0
        %v544 = vsel %vm522, %v414, 0
        %v545 = vsel %vm522, %v421, 0
        %v546 = vsel %vm522, %v428, 0
        %v547 = vsel %vm522, %v435, 0
        %v548 = vsel %vm522, %v442, 0
        %v549 = vsel %vm522, %v449, 0
        %v550 = vsel %vm522, %v456, 0
        %v551 = vsel %vm522, %v463, 0
        %v552 = vsel %vm522, %v470, 0
        %v553 = vsel %vm522, %v477, 0
        %v554 = vsel %vm522, %v484, 0
        %vm555 = vsmask.f32 7424
        %v557 = vshrl.u32 %v523, 16
        %v559 = vshll.u32 %v523, 16
        %v561 = vrot.slane %v559, 1
        %v562 = vor.u32 %v557, %v561
        %v564 = vshll.u32 %v539, 16
        %v566 = vrot.slane %v564, 1
        %v567 = vsel %vm555, %v562, %v566
        %v569 = vshrl.u32 %v524, 16
        %v571 = vshll.u32 %v524, 16
        %v573 = vrot.slane %v571, 1
        %v574 = vor.u32 %v569, %v573
        %v576 = vshll.u32 %v540, 16
        %v578 = vrot.slane %v576, 1
        %v579 = vsel %vm555, %v574, %v578
        %v581 = vshrl.u32 %v525, 16
        %v583 = vshll.u32 %v525, 16
        %v585 = vrot.slane %v583, 1
        %v586 = vor.u32 %v581, %v585
        %v588 = vshll.u32 %v541, 16
        %v590 = vrot.slane %v588, 1
        %v591 = vsel %vm555, %v586, %v590
        %v593 = vshrl.u32 %v526, 16
        %v595 = vshll.u32 %v526, 16
        %v597 = vrot.slane %v595, 1
        %v598 = vor.u32 %v593, %v597
        %v600 = vshll.u32 %v542, 16
        %v602 = vrot.slane %v600, 1
        %v603 = vsel %vm555, %v598, %v602
        %v605 = vshrl.u32 %v527, 16
        %v607 = vshll.u32 %v527, 16
        %v609 = vrot.slane %v607, 1
        %v610 = vor.u32 %v605, %v609
        %v612 = vshll.u32 %v543, 16
        %v614 = vrot.slane %v612, 1
        %v615 = vsel %vm555, %v610, %v614
        %v617 = vshrl.u32 %v528, 16
        %v619 = vshll.u32 %v528, 16
        %v621 = vrot.slane %v619, 1
        %v622 = vor.u32 %v617, %v621
        %v624 = vshll.u32 %v544, 16
        %v626 = vrot.slane %v624, 1
        %v627 = vsel %vm555, %v622, %v626
        %v629 = vshrl.u32 %v529, 16
        %v631 = vshll.u32 %v529, 16
        %v633 = vrot.slane %v631, 1
        %v634 = vor.u32 %v629, %v633
        %v636 = vshll.u32 %v545, 16
        %v638 = vrot.slane %v636, 1
        %v639 = vsel %vm555, %v634, %v638
        %v641 = vshrl.u32 %v530, 16
        %v643 = vshll.u32 %v530, 16
        %v645 = vrot.slane %v643, 1
        %v646 = vor.u32 %v641, %v645
        %v648 = vshll.u32 %v546, 16
        %v650 = vrot.slane %v648, 1
        %v651 = vsel %vm555, %v646, %v650
        %v653 = vshrl.u32 %v531, 16
        %v655 = vshll.u32 %v531, 16
        %v657 = vrot.slane %v655, 1
        %v658 = vor.u32 %v653, %v657
        %v660 = vshll.u32 %v547, 16
        %v662 = vrot.slane %v660, 1
        %v663 = vsel %vm555, %v658, %v662
        %v665 = vshrl.u32 %v532, 16
        %v667 = vshll.u32 %v532, 16
        %v669 = vrot.slane %v667, 1
        %v670 = vor.u32 %v665, %v669
        %v672 = vshll.u32 %v548, 16
        %v674 = vrot.slane %v672, 1
        %v675 = vsel %vm555, %v670, %v674
        %v677 = vshrl.u32 %v533, 16
        %v679 = vshll.u32 %v533, 16
        %v681 = vrot.slane %v679, 1
        %v682 = vor.u32 %v677, %v681
        %v684 = vshll.u32 %v549, 16
        %v686 = vrot.slane %v684, 1
        %v687 = vsel %vm555, %v682, %v686
        %v689 = vshrl.u32 %v534, 16
        %v691 = vshll.u32 %v534, 16
        %v693 = vrot.slane %v691, 1
        %v694 = vor.u32 %v689, %v693
        %v696 = vshll.u32 %v550, 16
        %v698 = vrot.slane %v696, 1
        %v699 = vsel %vm555, %v694, %v698
        %v701 = vshrl.u32 %v535, 16
        %v703 = vshll.u32 %v535, 16
        %v705 = vrot.slane %v703, 1
        %v706 = vor.u32 %v701, %v705
        %v708 = vshll.u32 %v551, 16
        %v710 = vrot.slane %v708, 1
        %v711 = vsel %vm555, %v706, %v710
        %v713 = vshrl.u32 %v536, 16
        %v715 = vshll.u32 %v536, 16
        %v717 = vrot.slane %v715, 1
        %v718 = vor.u32 %v713, %v717
        %v720 = vshll.u32 %v552, 16
        %v722 = vrot.slane %v720, 1
        %v723 = vsel %vm555, %v718, %v722
        %v725 = vshrl.u32 %v537, 16
        %v727 = vshll.u32 %v537, 16
        %v729 = vrot.slane %v727, 1
        %v730 = vor.u32 %v725, %v729
        %v732 = vshll.u32 %v553, 16
        %v734 = vrot.slane %v732, 1
        %v735 = vsel %vm555, %v730, %v734
        %v737 = vshrl.u32 %v538, 16
        %v739 = vshll.u32 %v538, 16
        %v741 = vrot.slane %v739, 1
        %v742 = vor.u32 %v737, %v741
        %v744 = vshll.u32 %v554, 16
        %v746 = vrot.slane %v744, 1
        %v747 = vsel %vm555, %v742, %v746
        %vm796 = vcmask 1046528
        %v797 = vrot.slane %v523, 1
        %v798 = vrot.slane %v539, 1
        %v799 = vsel %vm796, %v797, %v798
        %v800 = vrot.slane %v524, 1
        %v801 = vrot.slane %v540, 1
        %v802 = vsel %vm796, %v800, %v801
        %v803 = vrot.slane %v525, 1
        %v804 = vrot.slane %v541, 1
        %v805 = vsel %vm796, %v803, %v804
        %v806 = vrot.slane %v526, 1
        %v807 = vrot.slane %v542, 1
        %v808 = vsel %vm796, %v806, %v807
        %v809 = vrot.slane %v527, 1
        %v810 = vrot.slane %v543, 1
        %v811 = vsel %vm796, %v809, %v810
        %v812 = vrot.slane %v528, 1
        %v813 = vrot.slane %v544, 1
        %v814 = vsel %vm796, %v812, %v813
        %v815 = vrot.slane %v529, 1
        %v816 = vrot.slane %v545, 1
        %v817 = vsel %vm796, %v815, %v816
        %v818 = vrot.slane %v530, 1
        %v819 = vrot.slane %v546, 1
        %v820 = vsel %vm796, %v818, %v819
        %v821 = vrot.slane %v531, 1
        %v822 = vrot.slane %v547, 1
        %v823 = vsel %vm796, %v821, %v822
        %v824 = vrot.slane %v532, 1
        %v825 = vrot.slane %v548, 1
        %v826 = vsel %vm796, %v824, %v825
        %v827 = vrot.slane %v533, 1
        %v828 = vrot.slane %v549, 1
        %v829 = vsel %vm796, %v827, %v828
        %v830 = vrot.slane %v534, 1
        %v831 = vrot.slane %v550, 1
        %v832 = vsel %vm796, %v830, %v831
        %v833 = vrot.slane %v535, 1
        %v834 = vrot.slane %v551, 1
        %v835 = vsel %vm796, %v833, %v834
        %v836 = vrot.slane %v536, 1
        %v837 = vrot.slane %v552, 1
        %v838 = vsel %vm796, %v836, %v837
        %v839 = vrot.slane %v537, 1
        %v840 = vrot.slane %v553, 1
        %v841 = vsel %vm796, %v839, %v840
        %v842 = vrot.slane %v538, 1
        %v843 = vrot.slane %v554, 1
        %v844 = vsel %vm796, %v842, %v843
        %v861 = vld [vmem:[#allocation5] sm:$0xf]
        %v862 = vld [vmem:[#allocation5 + $0x4] sm:$0xf]
        %v863 = vld [vmem:[#allocation5 + $0x8] sm:$0xf]
        %v864 = vld [vmem:[#allocation5 + $0xc] sm:$0xf]
        %v865 = vld [vmem:[#allocation5 + $0x10] sm:$0xf]
        %v866 = vld [vmem:[#allocation5 + $0x14] sm:$0xf]
        %v867 = vld [vmem:[#allocation5 + $0x18] sm:$0xf]
        %v868 = vld [vmem:[#allocation5 + $0x1c] sm:$0xf]
        %v869 = vld [vmem:[#allocation5 + $0x20] sm:$0xf]
        %v870 = vld [vmem:[#allocation5 + $0x24] sm:$0xf]
        %v871 = vld [vmem:[#allocation5 + $0x28] sm:$0xf]
        %v872 = vld [vmem:[#allocation5 + $0x2c] sm:$0xf]
        %v873 = vld [vmem:[#allocation5 + $0x30] sm:$0xf]
        %v874 = vld [vmem:[#allocation5 + $0x34] sm:$0xf]
        %v875 = vld [vmem:[#allocation5 + $0x38] sm:$0xf]
        %v876 = vld [vmem:[#allocation5 + $0x3c] sm:$0xf]
        %v877 = vld [vmem:[#allocation5 + $0x40] sm:$0xf]
        %v878 = vld [vmem:[#allocation5 + $0x44] sm:$0xf]
        %v879 = vld [vmem:[#allocation5 + $0x48] sm:$0xf]
        %v880 = vld [vmem:[#allocation5 + $0x4c] sm:$0xf]
        %v881 = vld [vmem:[#allocation5 + $0x50] sm:$0xf]
        %v882 = vld [vmem:[#allocation5 + $0x54] sm:$0xf]
        %v883 = vld [vmem:[#allocation5 + $0x58] sm:$0xf]
        %v884 = vld [vmem:[#allocation5 + $0x5c] sm:$0xf]
        %v885 = vld [vmem:[#allocation5 + $0x60] sm:$0xf]
        %v886 = vld [vmem:[#allocation5 + $0x64] sm:$0xf]
        %v887 = vld [vmem:[#allocation5 + $0x68] sm:$0xf]
        %v888 = vld [vmem:[#allocation5 + $0x6c] sm:$0xf]
        %v889 = vld [vmem:[#allocation5 + $0x70] sm:$0xf]
        %v890 = vld [vmem:[#allocation5 + $0x74] sm:$0xf]
        %v891 = vld [vmem:[#allocation5 + $0x78] sm:$0xf]
        %v892 = vld [vmem:[#allocation5 + $0x7c] sm:$0xf]
        %v893 = vld [vmem:[#allocation5 + $0x80] sm:$0xf]
        %v894 = vld [vmem:[#allocation5 + $0x84] sm:$0xf]
        %v895 = vld [vmem:[#allocation5 + $0x88] sm:$0xf]
        %v896 = vld [vmem:[#allocation5 + $0x8c] sm:$0xf]
        %v897 = vld [vmem:[#allocation5 + $0x90] sm:$0xf]
        %v898 = vld [vmem:[#allocation5 + $0x94] sm:$0xf]
        %v899 = vld [vmem:[#allocation5 + $0x98] sm:$0xf]
        %v900 = vld [vmem:[#allocation5 + $0x9c] sm:$0xf]
        %v901 = vld [vmem:[#allocation5 + $0xa0] sm:$0xf]
        %v902 = vld [vmem:[#allocation5 + $0xa4] sm:$0xf]
        %v903 = vld [vmem:[#allocation5 + $0xa8] sm:$0xf]
        %v904 = vld [vmem:[#allocation5 + $0xac] sm:$0xf]
        %v905 = vld [vmem:[#allocation5 + $0xb0] sm:$0xf]
        %v906 = vld [vmem:[#allocation5 + $0xb4] sm:$0xf]
        %v907 = vld [vmem:[#allocation5 + $0xb8] sm:$0xf]
        %v908 = vld [vmem:[#allocation5 + $0xbc] sm:$0xf]
        %v909 = vld [vmem:[#allocation5 + $0xc0] sm:$0xf]
        %v910 = vld [vmem:[#allocation5 + $0xc4] sm:$0xf]
        %v911 = vld [vmem:[#allocation5 + $0xc8] sm:$0xf]
        %v912 = vld [vmem:[#allocation5 + $0xcc] sm:$0xf]
        %v913 = vld [vmem:[#allocation5 + $0xd0] sm:$0xf]
        %v914 = vld [vmem:[#allocation5 + $0xd4] sm:$0xf]
        %v915 = vld [vmem:[#allocation5 + $0xd8] sm:$0xf]
        %v916 = vld [vmem:[#allocation5 + $0xdc] sm:$0xf]
        %v917 = vld [vmem:[#allocation5 + $0xe0] sm:$0xf]
        %v918 = vld [vmem:[#allocation5 + $0xe4] sm:$0xf]
        %v919 = vld [vmem:[#allocation5 + $0xe8] sm:$0xf]
        %v920 = vld [vmem:[#allocation5 + $0xec] sm:$0xf]
        %v921 = vld [vmem:[#allocation5 + $0xf0] sm:$0xf]
        %v922 = vld [vmem:[#allocation5 + $0xf4] sm:$0xf]
        %v923 = vld [vmem:[#allocation5 + $0xf8] sm:$0xf]
        %v924 = vld [vmem:[#allocation5 + $0xfc] sm:$0xf]
        %v925 = vld [vmem:[#allocation5 + $0x100] sm:$0xf]
        %v926 = vld [vmem:[#allocation5 + $0x104] sm:$0xf]
        %v927 = vld [vmem:[#allocation5 + $0x108] sm:$0xf]
        %v928 = vld [vmem:[#allocation5 + $0x10c] sm:$0xf]
        %v929 = vld [vmem:[#allocation5 + $0x110] sm:$0xf]
        %v930 = vld [vmem:[#allocation5 + $0x114] sm:$0xf]
        %v931 = vld [vmem:[#allocation5 + $0x118] sm:$0xf]
        %v932 = vld [vmem:[#allocation5 + $0x11c] sm:$0xf]
        %v933 = vld [vmem:[#allocation5 + $0x120] sm:$0xf]
        %v934 = vld [vmem:[#allocation5 + $0x124] sm:$0xf]
        %v935 = vld [vmem:[#allocation5 + $0x128] sm:$0xf]
        %v936 = vld [vmem:[#allocation5 + $0x12c] sm:$0xf]
        %v937 = vld [vmem:[#allocation5 + $0x130] sm:$0xf]
        %v938 = vld [vmem:[#allocation5 + $0x134] sm:$0xf]
        %v939 = vld [vmem:[#allocation5 + $0x138] sm:$0xf]
        %v940 = vld [vmem:[#allocation5 + $0x13c] sm:$0xf]
        %v941 = vld [vmem:[#allocation5 + $0x140] sm:$0xf]
        %v942 = vld [vmem:[#allocation5 + $0x144] sm:$0xf]
        %v943 = vld [vmem:[#allocation5 + $0x148] sm:$0xf]
        %v944 = vld [vmem:[#allocation5 + $0x14c] sm:$0xf]
        %v945 = vld [vmem:[#allocation5 + $0x150] sm:$0xf]
        %v946 = vld [vmem:[#allocation5 + $0x154] sm:$0xf]
        %v947 = vld [vmem:[#allocation5 + $0x158] sm:$0xf]
        %v948 = vld [vmem:[#allocation5 + $0x15c] sm:$0xf]
        %v949 = vld [vmem:[#allocation5 + $0x160] sm:$0xf]
        %v950 = vld [vmem:[#allocation5 + $0x164] sm:$0xf]
        %v951 = vld [vmem:[#allocation5 + $0x168] sm:$0xf]
        %v952 = vld [vmem:[#allocation5 + $0x16c] sm:$0xf]
        %v953 = vld [vmem:[#allocation5 + $0x170] sm:$0xf]
        %v954 = vld [vmem:[#allocation5 + $0x174] sm:$0xf]
        %v955 = vld [vmem:[#allocation5 + $0x178] sm:$0xf]
        %v956 = vld [vmem:[#allocation5 + $0x17c] sm:$0xf]
        %v957 = vld [vmem:[#allocation5 + $0x180] sm:$0xf]
        %v958 = vld [vmem:[#allocation5 + $0x184] sm:$0xf]
        %v959 = vld [vmem:[#allocation5 + $0x188] sm:$0xf]
        %v960 = vld [vmem:[#allocation5 + $0x18c] sm:$0xf]
        %v961 = vld [vmem:[#allocation5 + $0x190] sm:$0xf]
        %v962 = vld [vmem:[#allocation5 + $0x194] sm:$0xf]
        %v963 = vld [vmem:[#allocation5 + $0x198] sm:$0xf]
        %v964 = vld [vmem:[#allocation5 + $0x19c] sm:$0xf]
        %v965 = vld [vmem:[#allocation5 + $0x1a0] sm:$0xf]
        %v966 = vld [vmem:[#allocation5 + $0x1a4] sm:$0xf]
        %v967 = vld [vmem:[#allocation5 + $0x1a8] sm:$0xf]
        %v968 = vld [vmem:[#allocation5 + $0x1ac] sm:$0xf]
        %v969 = vld [vmem:[#allocation5 + $0x1b0] sm:$0xf]
        %v970 = vld [vmem:[#allocation5 + $0x1b4] sm:$0xf]
        %v971 = vld [vmem:[#allocation5 + $0x1b8] sm:$0xf]
        %v972 = vld [vmem:[#allocation5 + $0x1bc] sm:$0xf]
        %v973 = vld [vmem:[#allocation5 + $0x1c0] sm:$0xf]
        %v974 = vld [vmem:[#allocation5 + $0x1c4] sm:$0xf]
        %v975 = vld [vmem:[#allocation5 + $0x1c8] sm:$0xf]
        %v976 = vld [vmem:[#allocation5 + $0x1cc] sm:$0xf]
        %v977 = vld [vmem:[#allocation5 + $0x1d0] sm:$0xf]
        %v978 = vld [vmem:[#allocation5 + $0x1d4] sm:$0xf]
        %v979 = vld [vmem:[#allocation5 + $0x1d8] sm:$0xf]
        %v980 = vld [vmem:[#allocation5 + $0x1dc] sm:$0xf]
        %v981 = vld [vmem:[#allocation5 + $0x1e0] sm:$0xf]
        %v982 = vld [vmem:[#allocation5 + $0x1e4] sm:$0xf]
        %v983 = vld [vmem:[#allocation5 + $0x1e8] sm:$0xf]
        %v984 = vld [vmem:[#allocation5 + $0x1ec] sm:$0xf]
        %v985 = vld [vmem:[#allocation5 + $0x1f0] sm:$0xf]
        %v986 = vld [vmem:[#allocation5 + $0x1f4] sm:$0xf]
        %v987 = vld [vmem:[#allocation5 + $0x1f8] sm:$0xf]
        %v988 = vld [vmem:[#allocation5 + $0x1fc] sm:$0xf]
        %v989 = vld [vmem:[#allocation5 + $0x200] sm:$0xf]
        %v990 = vld [vmem:[#allocation5 + $0x204] sm:$0xf]
        %v991 = vld [vmem:[#allocation5 + $0x208] sm:$0xf]
        %v992 = vld [vmem:[#allocation5 + $0x20c] sm:$0xf]
        %v993 = vld [vmem:[#allocation5 + $0x210] sm:$0xf]
        %v994 = vld [vmem:[#allocation5 + $0x214] sm:$0xf]
        %v995 = vld [vmem:[#allocation5 + $0x218] sm:$0xf]
        %v996 = vld [vmem:[#allocation5 + $0x21c] sm:$0xf]
        %v997 = vld [vmem:[#allocation5 + $0x220] sm:$0xf]
        %v998 = vld [vmem:[#allocation5 + $0x224] sm:$0xf]
        %v999 = vld [vmem:[#allocation5 + $0x228] sm:$0xf]
        %v1000 = vld [vmem:[#allocation5 + $0x22c] sm:$0xf]
        %v1001 = vld [vmem:[#allocation5 + $0x230] sm:$0xf]
        %v1002 = vld [vmem:[#allocation5 + $0x234] sm:$0xf]
        %v1003 = vld [vmem:[#allocation5 + $0x238] sm:$0xf]
        %v1004 = vld [vmem:[#allocation5 + $0x23c] sm:$0xf]
        %v1149 = vunpack.c.l.b16 %v861
        %v1150 = vunpack.c.l.b16 %v862
        %v1151 = vunpack.c.l.b16 %v863
        %v1152 = vunpack.c.l.b16 %v864
        %v1153 = vunpack.c.l.b16 %v865
        %v1154 = vunpack.c.l.b16 %v866
        %v1155 = vunpack.c.l.b16 %v867
        %v1156 = vunpack.c.l.b16 %v868
        %v1157 = vunpack.c.l.b16 %v869
        %v1158 = vunpack.c.l.b16 %v870
        %v1159 = vunpack.c.l.b16 %v871
        %v1160 = vunpack.c.l.b16 %v872
        %v1161 = vunpack.c.l.b16 %v873
        %v1162 = vunpack.c.l.b16 %v874
        %v1163 = vunpack.c.l.b16 %v875
        %v1164 = vunpack.c.l.b16 %v876
        %v1165 = vunpack.c.l.b16 %v877
        %v1166 = vunpack.c.l.b16 %v878
        %v1167 = vunpack.c.l.b16 %v879
        %v1168 = vunpack.c.l.b16 %v880
        %v1169 = vunpack.c.l.b16 %v881
        %v1170 = vunpack.c.l.b16 %v882
        %v1171 = vunpack.c.l.b16 %v883
        %v1172 = vunpack.c.l.b16 %v884
        %v1173 = vunpack.c.l.b16 %v885
        %v1174 = vunpack.c.l.b16 %v886
        %v1175 = vunpack.c.l.b16 %v887
        %v1176 = vunpack.c.l.b16 %v888
        %v1177 = vunpack.c.l.b16 %v889
        %v1178 = vunpack.c.l.b16 %v890
        %v1179 = vunpack.c.l.b16 %v891
        %v1180 = vunpack.c.l.b16 %v892
        %v1181 = vunpack.c.l.b16 %v893
        %v1182 = vunpack.c.l.b16 %v894
        %v1183 = vunpack.c.l.b16 %v895
        %v1184 = vunpack.c.l.b16 %v896
        %v1185 = vunpack.c.l.b16 %v897
        %v1186 = vunpack.c.l.b16 %v898
        %v1187 = vunpack.c.l.b16 %v899
        %v1188 = vunpack.c.l.b16 %v900
        %v1189 = vunpack.c.l.b16 %v901
        %v1190 = vunpack.c.l.b16 %v902
        %v1191 = vunpack.c.l.b16 %v903
        %v1192 = vunpack.c.l.b16 %v904
        %v1193 = vunpack.c.l.b16 %v905
        %v1194 = vunpack.c.l.b16 %v906
        %v1195 = vunpack.c.l.b16 %v907
        %v1196 = vunpack.c.l.b16 %v908
        %v1197 = vunpack.c.l.b16 %v909
        %v1198 = vunpack.c.l.b16 %v910
        %v1199 = vunpack.c.l.b16 %v911
        %v1200 = vunpack.c.l.b16 %v912
        %v1201 = vunpack.c.l.b16 %v913
        %v1202 = vunpack.c.l.b16 %v914
        %v1203 = vunpack.c.l.b16 %v915
        %v1204 = vunpack.c.l.b16 %v916
        %v1205 = vunpack.c.l.b16 %v917
        %v1206 = vunpack.c.l.b16 %v918
        %v1207 = vunpack.c.l.b16 %v919
        %v1208 = vunpack.c.l.b16 %v920
        %v1209 = vunpack.c.l.b16 %v921
        %v1210 = vunpack.c.l.b16 %v922
        %v1211 = vunpack.c.l.b16 %v923
        %v1212 = vunpack.c.l.b16 %v924
        %v1213 = vunpack.c.l.b16 %v925
        %v1214 = vunpack.c.l.b16 %v926
        %v1215 = vunpack.c.l.b16 %v927
        %v1216 = vunpack.c.l.b16 %v928
        %v1217 = vunpack.c.l.b16 %v929
        %v1218 = vunpack.c.l.b16 %v930
        %v1219 = vunpack.c.l.b16 %v931
        %v1220 = vunpack.c.l.b16 %v932
        %v1221 = vunpack.c.l.b16 %v933
        %v1222 = vunpack.c.l.b16 %v934
        %v1223 = vunpack.c.l.b16 %v935
        %v1224 = vunpack.c.l.b16 %v936
        %v1225 = vunpack.c.l.b16 %v937
        %v1226 = vunpack.c.l.b16 %v938
        %v1227 = vunpack.c.l.b16 %v939
        %v1228 = vunpack.c.l.b16 %v940
        %v1229 = vunpack.c.l.b16 %v941
        %v1230 = vunpack.c.l.b16 %v942
        %v1231 = vunpack.c.l.b16 %v943
        %v1232 = vunpack.c.l.b16 %v944
        %v1233 = vunpack.c.l.b16 %v945
        %v1234 = vunpack.c.l.b16 %v946
        %v1235 = vunpack.c.l.b16 %v947
        %v1236 = vunpack.c.l.b16 %v948
        %v1237 = vunpack.c.l.b16 %v949
        %v1238 = vunpack.c.l.b16 %v950
        %v1239 = vunpack.c.l.b16 %v951
        %v1240 = vunpack.c.l.b16 %v952
        %v1241 = vunpack.c.l.b16 %v953
        %v1242 = vunpack.c.l.b16 %v954
        %v1243 = vunpack.c.l.b16 %v955
        %v1244 = vunpack.c.l.b16 %v956
        %v1245 = vunpack.c.l.b16 %v957
        %v1246 = vunpack.c.l.b16 %v958
        %v1247 = vunpack.c.l.b16 %v959
        %v1248 = vunpack.c.l.b16 %v960
        %v1249 = vunpack.c.l.b16 %v961
        %v1250 = vunpack.c.l.b16 %v962
        %v1251 = vunpack.c.l.b16 %v963
        %v1252 = vunpack.c.l.b16 %v964
        %v1253 = vunpack.c.l.b16 %v965
        %v1254 = vunpack.c.l.b16 %v966
        %v1255 = vunpack.c.l.b16 %v967
        %v1256 = vunpack.c.l.b16 %v968
        %v1257 = vunpack.c.l.b16 %v969
        %v1258 = vunpack.c.l.b16 %v970
        %v1259 = vunpack.c.l.b16 %v971
        %v1260 = vunpack.c.l.b16 %v972
        %v1261 = vunpack.c.l.b16 %v973
        %v1262 = vunpack.c.l.b16 %v974
        %v1263 = vunpack.c.l.b16 %v975
        %v1264 = vunpack.c.l.b16 %v976
        %v1265 = vunpack.c.l.b16 %v977
        %v1266 = vunpack.c.l.b16 %v978
        %v1267 = vunpack.c.l.b16 %v979
        %v1268 = vunpack.c.l.b16 %v980
        %v1269 = vunpack.c.l.b16 %v981
        %v1270 = vunpack.c.l.b16 %v982
        %v1271 = vunpack.c.l.b16 %v983
        %v1272 = vunpack.c.l.b16 %v984
        %v1273 = vunpack.c.l.b16 %v985
        %v1274 = vunpack.c.l.b16 %v986
        %v1275 = vunpack.c.l.b16 %v987
        %v1276 = vunpack.c.l.b16 %v988
        %v1277 = vunpack.c.l.b16 %v989
        %v1278 = vunpack.c.l.b16 %v990
        %v1279 = vunpack.c.l.b16 %v991
        %v1280 = vunpack.c.l.b16 %v992
        %v1281 = vunpack.c.l.b16 %v993
        %v1282 = vunpack.c.l.b16 %v994
        %v1283 = vunpack.c.l.b16 %v995
        %v1284 = vunpack.c.l.b16 %v996
        %v1285 = vunpack.c.l.b16 %v997
        %v1286 = vunpack.c.l.b16 %v998
        %v1287 = vunpack.c.l.b16 %v999
        %v1288 = vunpack.c.l.b16 %v1000
        %v1289 = vunpack.c.l.b16 %v1001
        %v1290 = vunpack.c.l.b16 %v1002
        %v1291 = vunpack.c.l.b16 %v1003
        %v1292 = vunpack.c.l.b16 %v1004
        %v1293 = vpack.c.b16 %v1150, %v1149
        %v1294 = vpack.c.b16 %v1152, %v1151
        %v1295 = vpack.c.b16 %v1154, %v1153
        %v1296 = vpack.c.b16 %v1156, %v1155
        %v1297 = vpack.c.b16 %v1158, %v1157
        %v1298 = vpack.c.b16 %v1160, %v1159
        %v1299 = vpack.c.b16 %v1162, %v1161
        %v1300 = vpack.c.b16 %v1164, %v1163
        %v1301 = vpack.c.b16 %v1166, %v1165
        %v1302 = vpack.c.b16 %v1168, %v1167
        %v1303 = vpack.c.b16 %v1170, %v1169
        %v1304 = vpack.c.b16 %v1172, %v1171
        %v1305 = vpack.c.b16 %v1174, %v1173
        %v1306 = vpack.c.b16 %v1176, %v1175
        %v1307 = vpack.c.b16 %v1178, %v1177
        %v1308 = vpack.c.b16 %v1180, %v1179
        %v1309 = vpack.c.b16 %v1182, %v1181
        %v1310 = vpack.c.b16 %v1184, %v1183
        %v1311 = vpack.c.b16 %v1186, %v1185
        %v1312 = vpack.c.b16 %v1188, %v1187
        %v1313 = vpack.c.b16 %v1190, %v1189
        %v1314 = vpack.c.b16 %v1192, %v1191
        %v1315 = vpack.c.b16 %v1194, %v1193
        %v1316 = vpack.c.b16 %v1196, %v1195
        %v1317 = vpack.c.b16 %v1198, %v1197
        %v1318 = vpack.c.b16 %v1200, %v1199
        %v1319 = vpack.c.b16 %v1202, %v1201
        %v1320 = vpack.c.b16 %v1204, %v1203
        %v1321 = vpack.c.b16 %v1206, %v1205
        %v1322 = vpack.c.b16 %v1208, %v1207
        %v1323 = vpack.c.b16 %v1210, %v1209
        %v1324 = vpack.c.b16 %v1212, %v1211
        %v1325 = vpack.c.b16 %v1214, %v1213
        %v1326 = vpack.c.b16 %v1216, %v1215
        %v1327 = vpack.c.b16 %v1218, %v1217
        %v1328 = vpack.c.b16 %v1220, %v1219
        %v1329 = vpack.c.b16 %v1222, %v1221
        %v1330 = vpack.c.b16 %v1224, %v1223
        %v1331 = vpack.c.b16 %v1226, %v1225
        %v1332 = vpack.c.b16 %v1228, %v1227
        %v1333 = vpack.c.b16 %v1230, %v1229
        %v1334 = vpack.c.b16 %v1232, %v1231
        %v1335 = vpack.c.b16 %v1234, %v1233
        %v1336 = vpack.c.b16 %v1236, %v1235
        %v1337 = vpack.c.b16 %v1238, %v1237
        %v1338 = vpack.c.b16 %v1240, %v1239
        %v1339 = vpack.c.b16 %v1242, %v1241
        %v1340 = vpack.c.b16 %v1244, %v1243
        %v1341 = vpack.c.b16 %v1246, %v1245
        %v1342 = vpack.c.b16 %v1248, %v1247
        %v1343 = vpack.c.b16 %v1250, %v1249
        %v1344 = vpack.c.b16 %v1252, %v1251
        %v1345 = vpack.c.b16 %v1254, %v1253
        %v1346 = vpack.c.b16 %v1256, %v1255
        %v1347 = vpack.c.b16 %v1258, %v1257
        %v1348 = vpack.c.b16 %v1260, %v1259
        %v1349 = vpack.c.b16 %v1262, %v1261
        %v1350 = vpack.c.b16 %v1264, %v1263
        %v1351 = vpack.c.b16 %v1266, %v1265
        %v1352 = vpack.c.b16 %v1268, %v1267
        %v1353 = vpack.c.b16 %v1270, %v1269
        %v1354 = vpack.c.b16 %v1272, %v1271
        %v1355 = vpack.c.b16 %v1274, %v1273
        %v1356 = vpack.c.b16 %v1276, %v1275
        %v1357 = vpack.c.b16 %v1278, %v1277
        %v1358 = vpack.c.b16 %v1280, %v1279
        %v1359 = vpack.c.b16 %v1282, %v1281
        %v1360 = vpack.c.b16 %v1284, %v1283
        %v1361 = vpack.c.b16 %v1286, %v1285
        %v1362 = vpack.c.b16 %v1288, %v1287
        %v1363 = vpack.c.b16 %v1290, %v1289
        %v1364 = vpack.c.b16 %v1292, %v1291
        %1437 = vmatprep.subr.bf16.mxu0 0
        %1438 = vmatpush1.bf16.msra.mxu0 %v1293
        %1439 = vmatprep.subr.bf16.mxu0 0
        %1440 = vmatpush1.bf16.msra.mxu0 %v1294
        %1441 = vmatprep.subr.bf16.mxu0 0
        %1442 = vmatpush1.bf16.msra.mxu0 %v1295
        %1443 = vmatprep.subr.bf16.mxu0 0
        %1444 = vmatpush1.bf16.msra.mxu0 %v1296
        %1445 = vmatprep.subr.bf16.mxu0 0
        %1446 = vmatpush1.bf16.msra.mxu0 %v1297
        %1447 = vmatprep.subr.bf16.mxu0 0
        %1448 = vmatpush1.bf16.msra.mxu0 %v1298
        %1449 = vmatprep.subr.bf16.mxu0 0
        %1450 = vmatpush1.bf16.msra.mxu0 %v1299
        %1451 = vmatprep.subr.bf16.mxu0 0
        %1452 = vmatpush1.bf16.msra.mxu0 %v1300
        %1453 = vmatprep.subr.bf16.mxu0 0
        %1454 = vmatpush1.bf16.msra.mxu0 %v1301
        %1455 = vmatprep.subr.bf16.mxu0 0
        %1456 = vmatpush1.bf16.msra.mxu0 %v1302
        %1457 = vmatprep.subr.bf16.mxu0 0
        %1458 = vmatpush1.bf16.msra.mxu0 %v1303
        %1459 = vmatprep.subr.bf16.mxu0 0
        %1460 = vmatpush1.bf16.msra.mxu0 %v1304
        %1461 = vmatprep.subr.bf16.mxu0 0
        %1462 = vmatpush1.bf16.msra.mxu0 %v1305
        %1463 = vmatprep.subr.bf16.mxu0 0
        %1464 = vmatpush1.bf16.msra.mxu0 %v1306
        %1465 = vmatprep.subr.bf16.mxu0 0
        %1466 = vmatpush1.bf16.msra.mxu0 %v1307
        %1467 = vmatprep.subr.bf16.mxu0 0
        %1468 = vmatpush1.bf16.msra.mxu0 %v1308
        %1469 = vmatprep.mubr.bf16.mxu0 0
        %1470 = vmatmul.mubr.bf16.gmra.mrb[0].mxu0 0
        %v1471 = vpop.f32.mrb[0].mxu0
        %v1472 = vadd.f32 0.0, %v1471
        %v1473 = vpop.f32.mrb[0].mxu0
        %v1474 = vpop.f32.mrb[0].mxu0
        %v1475 = vadd.f32 0.0, %v1474
        %v1476 = vpop.f32.mrb[0].mxu0
        %1477 = vmatprep.mubr.bf16.mxu0 %v567
        %1478 = vmatmul.mubr.bf16.gmra.mrb[0].mxu0 %v523
        %v1479 = vpop.f32.mrb[0].mxu0
        %v1480 = vadd.f32 0.0, %v1479
        %v1481 = vpop.f32.mrb[0].mxu0
        %v1482 = vpop.f32.mrb[0].mxu0
        %v1483 = vadd.f32 0.0, %v1482
        %v1484 = vpop.f32.mrb[0].mxu0
        %1485 = vmatprep.mubr.bf16.mxu0 %v579
        %1486 = vmatmul.mubr.bf16.gmra.mrb[0].mxu0 %v524
        %v1487 = vpop.f32.mrb[0].mxu0
        %v1488 = vadd.f32 0.0, %v1487
        %v1489 = vpop.f32.mrb[0].mxu0
        %v1490 = vpop.f32.mrb[0].mxu0
        %v1491 = vadd.f32 0.0, %v1490
        %v1492 = vpop.f32.mrb[0].mxu0
        %1493 = vmatprep.mubr.bf16.mxu0 %v591
        %1494 = vmatmul.mubr.bf16.gmra.mrb[0].mxu0 %v525
        %v1495 = vpop.f32.mrb[0].mxu0
        %v1496 = vadd.f32 0.0, %v1495
        %v1497 = vpop.f32.mrb[0].mxu0
        %v1498 = vpop.f32.mrb[0].mxu0
        %v1499 = vadd.f32 0.0, %v1498
        %v1500 = vpop.f32.mrb[0].mxu0
        %1501 = vmatprep.mubr.bf16.mxu0 %v603
        %1502 = vmatmul.mubr.bf16.gmra.mrb[0].mxu0 %v526
        %v1503 = vpop.f32.mrb[0].mxu0
        %v1504 = vadd.f32 0.0, %v1503
        %v1505 = vpop.f32.mrb[0].mxu0
        %v1506 = vpop.f32.mrb[0].mxu0
        %v1507 = vadd.f32 0.0, %v1506
        %v1508 = vpop.f32.mrb[0].mxu0
        %1509 = vmatprep.mubr.bf16.mxu0 %v615
        %1510 = vmatmul.mubr.bf16.gmra.mrb[0].mxu0 %v527
        %v1511 = vpop.f32.mrb[0].mxu0
        %v1512 = vadd.f32 0.0, %v1511
        %v1513 = vpop.f32.mrb[0].mxu0
        %v1514 = vpop.f32.mrb[0].mxu0
        %v1515 = vadd.f32 0.0, %v1514
        %v1516 = vpop.f32.mrb[0].mxu0
        %1517 = vmatprep.mubr.bf16.mxu0 %v627
        %1518 = vmatmul.mubr.bf16.gmra.mrb[0].mxu0 %v528
        %v1519 = vpop.f32.mrb[0].mxu0
        %v1520 = vadd.f32 0.0, %v1519
        %v1521 = vpop.f32.mrb[0].mxu0
        %v1522 = vpop.f32.mrb[0].mxu0
        %v1523 = vadd.f32 0.0, %v1522
        %v1524 = vpop.f32.mrb[0].mxu0
        %1525 = vmatprep.mubr.bf16.mxu0 %v639
        %1526 = vmatmul.mubr.bf16.gmra.mrb[0].mxu0 %v529
        %v1527 = vpop.f32.mrb[0].mxu0
        %v1528 = vadd.f32 0.0, %v1527
        %v1529 = vpop.f32.mrb[0].mxu0
        %v1530 = vpop.f32.mrb[0].mxu0
        %v1531 = vadd.f32 0.0, %v1530
        %v1532 = vpop.f32.mrb[0].mxu0
        %1533 = vmatprep.mubr.bf16.mxu0 %v651
        %1534 = vmatmul.mubr.bf16.gmra.mrb[0].mxu0 %v530
        %v1535 = vpop.f32.mrb[0].mxu0
        %v1536 = vadd.f32 0.0, %v1535
        %v1537 = vpop.f32.mrb[0].mxu0
        %v1538 = vpop.f32.mrb[0].mxu0
        %v1539 = vadd.f32 0.0, %v1538
        %v1540 = vpop.f32.mrb[0].mxu0
        %1541 = vmatprep.mubr.bf16.mxu0 %v663
        %1542 = vmatmul.mubr.bf16.gmra.mrb[0].mxu0 %v531
        %v1543 = vpop.f32.mrb[0].mxu0
        %v1544 = vadd.f32 0.0, %v1543
        %v1545 = vpop.f32.mrb[0].mxu0
        %v1546 = vpop.f32.mrb[0].mxu0
        %v1547 = vadd.f32 0.0, %v1546
        %v1548 = vpop.f32.mrb[0].mxu0
        %1549 = vmatprep.mubr.bf16.mxu0 %v675
        %1550 = vmatmul.mubr.bf16.gmra.mrb[0].mxu0 %v532
        %v1551 = vpop.f32.mrb[0].mxu0
        %v1552 = vadd.f32 0.0, %v1551
        %v1553 = vpop.f32.mrb[0].mxu0
        %v1554 = vpop.f32.mrb[0].mxu0
        %v1555 = vadd.f32 0.0, %v1554
        %v1556 = vpop.f32.mrb[0].mxu0
        %1557 = vmatprep.mubr.bf16.mxu0 %v687
        %1558 = vmatmul.mubr.bf16.gmra.mrb[0].mxu0 %v533
        %v1559 = vpop.f32.mrb[0].mxu0
        %v1560 = vadd.f32 0.0, %v1559
        %v1561 = vpop.f32.mrb[0].mxu0
        %v1562 = vpop.f32.mrb[0].mxu0
        %v1563 = vadd.f32 0.0, %v1562
        %v1564 = vpop.f32.mrb[0].mxu0
        %1565 = vmatprep.mubr.bf16.mxu0 %v699
        %1566 = vmatmul.mubr.bf16.gmra.mrb[0].mxu0 %v534
        %v1567 = vpop.f32.mrb[0].mxu0
        %v1568 = vadd.f32 0.0, %v1567
        %v1569 = vpop.f32.mrb[0].mxu0
        %v1570 = vpop.f32.mrb[0].mxu0
        %v1571 = vadd.f32 0.0, %v1570
        %v1572 = vpop.f32.mrb[0].mxu0
        %1573 = vmatprep.mubr.bf16.mxu0 %v711
        %1574 = vmatmul.mubr.bf16.gmra.mrb[0].mxu0 %v535
        %v1575 = vpop.f32.mrb[0].mxu0
        %v1576 = vadd.f32 0.0, %v1575
        %v1577 = vpop.f32.mrb[0].mxu0
        %v1578 = vpop.f32.mrb[0].mxu0
        %v1579 = vadd.f32 0.0, %v1578
        %v1580 = vpop.f32.mrb[0].mxu0
        %1581 = vmatprep.mubr.bf16.mxu0 %v723
        %1582 = vmatmul.mubr.bf16.gmra.mrb[0].mxu0 %v536
        %v1583 = vpop.f32.mrb[0].mxu0
        %v1584 = vadd.f32 0.0, %v1583
        %v1585 = vpop.f32.mrb[0].mxu0
        %v1586 = vpop.f32.mrb[0].mxu0
        %v1587 = vadd.f32 0.0, %v1586
        %v1588 = vpop.f32.mrb[0].mxu0
        %1589 = vmatprep.mubr.bf16.mxu0 %v735
        %1590 = vmatmul.mubr.bf16.gmra.mrb[0].mxu0 %v537
        %v1591 = vpop.f32.mrb[0].mxu0
        %v1592 = vadd.f32 0.0, %v1591
        %v1593 = vpop.f32.mrb[0].mxu0
        %v1594 = vpop.f32.mrb[0].mxu0
        %v1595 = vadd.f32 0.0, %v1594
        %v1596 = vpop.f32.mrb[0].mxu0
        %1597 = vdwg.mxu0
        %1598 = vmatprep.subr.bf16.mxu0 0
        %1599 = vmatpush1.bf16.msra.mxu0 %v1309
        %1600 = vmatprep.subr.bf16.mxu0 0
        %1601 = vmatpush1.bf16.msra.mxu0 %v1310
        %1602 = vmatprep.subr.bf16.mxu0 0
        %1603 = vmatpush1.bf16.msra.mxu0 %v1311
        %1604 = vmatprep.subr.bf16.mxu0 0
        %1605 = vmatpush1.bf16.msra.mxu0 %v1312
        %1606 = vmatprep.subr.bf16.mxu0 0
        %1607 = vmatpush1.bf16.msra.mxu0 %v1313
        %1608 = vmatprep.subr.bf16.mxu0 0
        %1609 = vmatpush1.bf16.msra.mxu0 %v1314
        %1610 = vmatprep.subr.bf16.mxu0 0
        %1611 = vmatpush1.bf16.msra.mxu0 %v1315
        %1612 = vmatprep.subr.bf16.mxu0 0
        %1613 = vmatpush1.bf16.msra.mxu0 %v1316
        %1614 = vmatprep.subr.bf16.mxu0 0
        %1615 = vmatpush1.bf16.msra.mxu0 %v1317
        %1616 = vmatprep.subr.bf16.mxu0 0
        %1617 = vmatpush1.bf16.msra.mxu0 %v1318
        %1618 = vmatprep.subr.bf16.mxu0 0
        %1619 = vmatpush1.bf16.msra.mxu0 %v1319
        %1620 = vmatprep.subr.bf16.mxu0 0
        %1621 = vmatpush1.bf16.msra.mxu0 %v1320
        %1622 = vmatprep.subr.bf16.mxu0 0
        %1623 = vmatpush1.bf16.msra.mxu0 %v1321
        %1624 = vmatprep.subr.bf16.mxu0 0
        %1625 = vmatpush1.bf16.msra.mxu0 %v1322
        %1626 = vmatprep.subr.bf16.mxu0 0
        %1627 = vmatpush1.bf16.msra.mxu0 %v1323
        %1628 = vmatprep.subr.bf16.mxu0 0
        %1629 = vmatpush1.bf16.msra.mxu0 %v1324
        %1630 = vmatprep.mubr.bf16.mxu0 %v523
        %1631 = vmatmul.mubr.bf16.gmra.mrb[0].mxu0 0
        %v1632 = vpop.f32.mrb[0].mxu0
        %v1633 = vadd.f32 %v1472, %v1632
        %v1634 = vpop.f32.mrb[0].mxu0
        %v1635 = vpop.f32.mrb[0].mxu0
        %v1636 = vadd.f32 %v1475, %v1635
        %v1637 = vpop.f32.mrb[0].mxu0
        %1638 = vmatprep.mubr.bf16.mxu0 %v524
        %1639 = vmatmul.mubr.bf16.gmra.mrb[0].mxu0 %v799
        %v1640 = vpop.f32.mrb[0].mxu0
        %v1641 = vadd.f32 %v1480, %v1640
        %v1642 = vpop.f32.mrb[0].mxu0
        %v1643 = vpop.f32.mrb[0].mxu0
        %v1644 = vadd.f32 %v1483, %v1643
        %v1645 = vpop.f32.mrb[0].mxu0
        %1646 = vmatprep.mubr.bf16.mxu0 %v525
        %1647 = vmatmul.mubr.bf16.gmra.mrb[0].mxu0 %v802
        %v1648 = vpop.f32.mrb[0].mxu0
        %v1649 = vadd.f32 %v1488, %v1648
        %v1650 = vpop.f32.mrb[0].mxu0
        %v1651 = vpop.f32.mrb[0].mxu0
        %v1652 = vadd.f32 %v1491, %v1651
        %v1653 = vpop.f32.mrb[0].mxu0
        %1654 = vmatprep.mubr.bf16.mxu0 %v526
        %1655 = vmatmul.mubr.bf16.gmra.mrb[0].mxu0 %v805
        %v1656 = vpop.f32.mrb[0].mxu0
        %v1657 = vadd.f32 %v1496, %v1656
        %v1658 = vpop.f32.mrb[0].mxu0
        %v1659 = vpop.f32.mrb[0].mxu0
        %v1660 = vadd.f32 %v1499, %v1659
        %v1661 = vpop.f32.mrb[0].mxu0
        %1662 = vmatprep.mubr.bf16.mxu0 %v527
        %1663 = vmatmul.mubr.bf16.gmra.mrb[0].mxu0 %v808
        %v1664 = vpop.f32.mrb[0].mxu0
        %v1665 = vadd.f32 %v1504, %v1664
        %v1666 = vpop.f32.mrb[0].mxu0
        %v1667 = vpop.f32.mrb[0].mxu0
        %v1668 = vadd.f32 %v1507, %v1667
        %v1669 = vpop.f32.mrb[0].mxu0
        %1670 = vmatprep.mubr.bf16.mxu0 %v528
        %1671 = vmatmul.mubr.bf16.gmra.mrb[0].mxu0 %v811
        %v1672 = vpop.f32.mrb[0].mxu0
        %v1673 = vadd.f32 %v1512, %v1672
        %v1674 = vpop.f32.mrb[0].mxu0
        %v1675 = vpop.f32.mrb[0].mxu0
        %v1676 = vadd.f32 %v1515, %v1675
        %v1677 = vpop.f32.mrb[0].mxu0
        %1678 = vmatprep.mubr.bf16.mxu0 %v529
        %1679 = vmatmul.mubr.bf16.gmra.mrb[0].mxu0 %v814
        %v1680 = vpop.f32.mrb[0].mxu0
        %v1681 = vadd.f32 %v1520, %v1680
        %v1682 = vpop.f32.mrb[0].mxu0
        %v1683 = vpop.f32.mrb[0].mxu0
        %v1684 = vadd.f32 %v1523, %v1683
        %v1685 = vpop.f32.mrb[0].mxu0
        %1686 = vmatprep.mubr.bf16.mxu0 %v530
        %1687 = vmatmul.mubr.bf16.gmra.mrb[0].mxu0 %v817
        %v1688 = vpop.f32.mrb[0].mxu0
        %v1689 = vadd.f32 %v1528, %v1688
        %v1690 = vpop.f32.mrb[0].mxu0
        %v1691 = vpop.f32.mrb[0].mxu0
        %v1692 = vadd.f32 %v1531, %v1691
        %v1693 = vpop.f32.mrb[0].mxu0
        %1694 = vmatprep.mubr.bf16.mxu0 %v531
        %1695 = vmatmul.mubr.bf16.gmra.mrb[0].mxu0 %v820
        %v1696 = vpop.f32.mrb[0].mxu0
        %v1697 = vadd.f32 %v1536, %v1696
        %v1698 = vpop.f32.mrb[0].mxu0
        %v1699 = vpop.f32.mrb[0].mxu0
        %v1700 = vadd.f32 %v1539, %v1699
        %v1701 = vpop.f32.mrb[0].mxu0
        %1702 = vmatprep.mubr.bf16.mxu0 %v532
        %1703 = vmatmul.mubr.bf16.gmra.mrb[0].mxu0 %v823
        %v1704 = vpop.f32.mrb[0].mxu0
        %v1705 = vadd.f32 %v1544, %v1704
        %v1706 = vpop.f32.mrb[0].mxu0
        %v1707 = vpop.f32.mrb[0].mxu0
        %v1708 = vadd.f32 %v1547, %v1707
        %v1709 = vpop.f32.mrb[0].mxu0
        %1710 = vmatprep.mubr.bf16.mxu0 %v533
        %1711 = vmatmul.mubr.bf16.gmra.mrb[0].mxu0 %v826
        %v1712 = vpop.f32.mrb[0].mxu0
        %v1713 = vadd.f32 %v1552, %v1712
        %v1714 = vpop.f32.mrb[0].mxu0
        %v1715 = vpop.f32.mrb[0].mxu0
        %v1716 = vadd.f32 %v1555, %v1715
        %v1717 = vpop.f32.mrb[0].mxu0
        %1718 = vmatprep.mubr.bf16.mxu0 %v534
        %1719 = vmatmul.mubr.bf16.gmra.mrb[0].mxu0 %v829
        %v1720 = vpop.f32.mrb[0].mxu0
        %v1721 = vadd.f32 %v1560, %v1720
        %v1722 = vpop.f32.mrb[0].mxu0
        %v1723 = vpop.f32.mrb[0].mxu0
        %v1724 = vadd.f32 %v1563, %v1723
        %v1725 = vpop.f32.mrb[0].mxu0
        %1726 = vmatprep.mubr.bf16.mxu0 %v535
        %1727 = vmatmul.mubr.bf16.gmra.mrb[0].mxu0 %v832
        %v1728 = vpop.f32.mrb[0].mxu0
        %v1729 = vadd.f32 %v1568, %v1728
        %v1730 = vpop.f32.mrb[0].mxu0
        %v1731 = vpop.f32.mrb[0].mxu0
        %v1732 = vadd.f32 %v1571, %v1731
        %v1733 = vpop.f32.mrb[0].mxu0
        %1734 = vmatprep.mubr.bf16.mxu0 %v536
        %1735 = vmatmul.mubr.bf16.gmra.mrb[0].mxu0 %v835
        %v1736 = vpop.f32.mrb[0].mxu0
        %v1737 = vadd.f32 %v1576, %v1736
        %v1738 = vpop.f32.mrb[0].mxu0
        %v1739 = vpop.f32.mrb[0].mxu0
        %v1740 = vadd.f32 %v1579, %v1739
        %v1741 = vpop.f32.mrb[0].mxu0
        %1742 = vmatprep.mubr.bf16.mxu0 %v537
        %1743 = vmatmul.mubr.bf16.gmra.mrb[0].mxu0 %v838
        %v1744 = vpop.f32.mrb[0].mxu0
        %v1745 = vadd.f32 %v1584, %v1744
        %v1746 = vpop.f32.mrb[0].mxu0
        %v1747 = vpop.f32.mrb[0].mxu0
        %v1748 = vadd.f32 %v1587, %v1747
        %v1749 = vpop.f32.mrb[0].mxu0
        %1750 = vmatprep.mubr.bf16.mxu0 %v538
        %1751 = vmatmul.mubr.bf16.gmra.mrb[0].mxu0 %v841
        %v1752 = vpop.f32.mrb[0].mxu0
        %v1753 = vadd.f32 %v1592, %v1752
        %v1754 = vpop.f32.mrb[0].mxu0
        %v1755 = vpop.f32.mrb[0].mxu0
        %v1756 = vadd.f32 %v1595, %v1755
        %v1757 = vpop.f32.mrb[0].mxu0
        %1758 = vdwg.mxu0
        %1759 = vmatprep.subr.bf16.mxu0 0
        %1760 = vmatpush1.bf16.msra.mxu0 %v1325
        %1761 = vmatprep.subr.bf16.mxu0 0
        %1762 = vmatpush1.bf16.msra.mxu0 %v1326
        %1763 = vmatprep.subr.bf16.mxu0 0
        %1764 = vmatpush1.bf16.msra.mxu0 %v1327
        %1765 = vmatprep.subr.bf16.mxu0 0
        %1766 = vmatpush1.bf16.msra.mxu0 %v1328
        %1767 = vmatprep.subr.bf16.mxu0 0
        %1768 = vmatpush1.bf16.msra.mxu0 %v1329
        %1769 = vmatprep.subr.bf16.mxu0 0
        %1770 = vmatpush1.bf16.msra.mxu0 %v1330
        %1771 = vmatprep.subr.bf16.mxu0 0
        %1772 = vmatpush1.bf16.msra.mxu0 %v1331
        %1773 = vmatprep.subr.bf16.mxu0 0
        %1774 = vmatpush1.bf16.msra.mxu0 %v1332
        %1775 = vmatprep.subr.bf16.mxu0 0
        %1776 = vmatpush1.bf16.msra.mxu0 %v1333
        %1777 = vmatprep.subr.bf16.mxu0 0
        %1778 = vmatpush1.bf16.msra.mxu0 %v1334
        %1779 = vmatprep.subr.bf16.mxu0 0
        %1780 = vmatpush1.bf16.msra.mxu0 %v1335
        %1781 = vmatprep.subr.bf16.mxu0 0
        %1782 = vmatpush1.bf16.msra.mxu0 %v1336
        %1783 = vmatprep.subr.bf16.mxu0 0
        %1784 = vmatpush1.bf16.msra.mxu0 %v1337
        %1785 = vmatprep.subr.bf16.mxu0 0
        %1786 = vmatpush1.bf16.msra.mxu0 %v1338
        %1787 = vmatprep.subr.bf16.mxu0 0
        %1788 = vmatpush1.bf16.msra.mxu0 %v1339
        %1789 = vmatprep.subr.bf16.mxu0 0
        %1790 = vmatpush1.bf16.msra.mxu0 %v1340
        %1791 = vmatprep.mubr.bf16.mxu0 %v799
        %1792 = vmatmul.mubr.bf16.gmra.mrb[0].mxu0 %v567
        %v1793 = vpop.f32.mrb[0].mxu0
        %v1794 = vadd.f32 %v1633, %v1793
        %v1795 = vpop.f32.mrb[0].mxu0
        %v1796 = vpop.f32.mrb[0].mxu0
        %v1797 = vadd.f32 %v1636, %v1796
        %v1798 = vpop.f32.mrb[0].mxu0
        %1799 = vmatprep.mubr.bf16.mxu0 %v802
        %1800 = vmatmul.mubr.bf16.gmra.mrb[0].mxu0 %v579
        %v1801 = vpop.f32.mrb[0].mxu0
        %v1802 = vadd.f32 %v1641, %v1801
        %v1803 = vpop.f32.mrb[0].mxu0
        %v1804 = vpop.f32.mrb[0].mxu0
        %v1805 = vadd.f32 %v1644, %v1804
        %v1806 = vpop.f32.mrb[0].mxu0
        %1807 = vmatprep.mubr.bf16.mxu0 %v805
        %1808 = vmatmul.mubr.bf16.gmra.mrb[0].mxu0 %v591
        %v1809 = vpop.f32.mrb[0].mxu0
        %v1810 = vadd.f32 %v1649, %v1809
        %v1811 = vpop.f32.mrb[0].mxu0
        %v1812 = vpop.f32.mrb[0].mxu0
        %v1813 = vadd.f32 %v1652, %v1812
        %v1814 = vpop.f32.mrb[0].mxu0
        %1815 = vmatprep.mubr.bf16.mxu0 %v808
        %1816 = vmatmul.mubr.bf16.gmra.mrb[0].mxu0 %v603
        %v1817 = vpop.f32.mrb[0].mxu0
        %v1818 = vadd.f32 %v1657, %v1817
        %v1819 = vpop.f32.mrb[0].mxu0
        %v1820 = vpop.f32.mrb[0].mxu0
        %v1821 = vadd.f32 %v1660, %v1820
        %v1822 = vpop.f32.mrb[0].mxu0
        %1823 = vmatprep.mubr.bf16.mxu0 %v811
        %1824 = vmatmul.mubr.bf16.gmra.mrb[0].mxu0 %v615
        %v1825 = vpop.f32.mrb[0].mxu0
        %v1826 = vadd.f32 %v1665, %v1825
        %v1827 = vpop.f32.mrb[0].mxu0
        %v1828 = vpop.f32.mrb[0].mxu0
        %v1829 = vadd.f32 %v1668, %v1828
        %v1830 = vpop.f32.mrb[0].mxu0
        %1831 = vmatprep.mubr.bf16.mxu0 %v814
        %1832 = vmatmul.mubr.bf16.gmra.mrb[0].mxu0 %v627
        %v1833 = vpop.f32.mrb[0].mxu0
        %v1834 = vadd.f32 %v1673, %v1833
        %v1835 = vpop.f32.mrb[0].mxu0
        %v1836 = vpop.f32.mrb[0].mxu0
        %v1837 = vadd.f32 %v1676, %v1836
        %v1838 = vpop.f32.mrb[0].mxu0
        %1839 = vmatprep.mubr.bf16.mxu0 %v817
        %1840 = vmatmul.mubr.bf16.gmra.mrb[0].mxu0 %v639
        %v1841 = vpop.f32.mrb[0].mxu0
        %v1842 = vadd.f32 %v1681, %v1841
        %v1843 = vpop.f32.mrb[0].mxu0
        %v1844 = vpop.f32.mrb[0].mxu0
        %v1845 = vadd.f32 %v1684, %v1844
        %v1846 = vpop.f32.mrb[0].mxu0
        %1847 = vmatprep.mubr.bf16.mxu0 %v820
        %1848 = vmatmul.mubr.bf16.gmra.mrb[0].mxu0 %v651
        %v1849 = vpop.f32.mrb[0].mxu0
        %v1850 = vadd.f32 %v1689, %v1849
        %v1851 = vpop.f32.mrb[0].mxu0
        %v1852 = vpop.f32.mrb[0].mxu0
        %v1853 = vadd.f32 %v1692, %v1852
        %v1854 = vpop.f32.mrb[0].mxu0
        %1855 = vmatprep.mubr.bf16.mxu0 %v823
        %1856 = vmatmul.mubr.bf16.gmra.mrb[0].mxu0 %v663
        %v1857 = vpop.f32.mrb[0].mxu0
        %v1858 = vadd.f32 %v1697, %v1857
        %v1859 = vpop.f32.mrb[0].mxu0
        %v1860 = vpop.f32.mrb[0].mxu0
        %v1861 = vadd.f32 %v1700, %v1860
        %v1862 = vpop.f32.mrb[0].mxu0
        %1863 = vmatprep.mubr.bf16.mxu0 %v826
        %1864 = vmatmul.mubr.bf16.gmra.mrb[0].mxu0 %v675
        %v1865 = vpop.f32.mrb[0].mxu0
        %v1866 = vadd.f32 %v1705, %v1865
        %v1867 = vpop.f32.mrb[0].mxu0
        %v1868 = vpop.f32.mrb[0].mxu0
        %v1869 = vadd.f32 %v1708, %v1868
        %v1870 = vpop.f32.mrb[0].mxu0
        %1871 = vmatprep.mubr.bf16.mxu0 %v829
        %1872 = vmatmul.mubr.bf16.gmra.mrb[0].mxu0 %v687
        %v1873 = vpop.f32.mrb[0].mxu0
        %v1874 = vadd.f32 %v1713, %v1873
        %v1875 = vpop.f32.mrb[0].mxu0
        %v1876 = vpop.f32.mrb[0].mxu0
        %v1877 = vadd.f32 %v1716, %v1876
        %v1878 = vpop.f32.mrb[0].mxu0
        %1879 = vmatprep.mubr.bf16.mxu0 %v832
        %1880 = vmatmul.mubr.bf16.gmra.mrb[0].mxu0 %v699
        %v1881 = vpop.f32.mrb[0].mxu0
        %v1882 = vadd.f32 %v1721, %v1881
        %v1883 = vpop.f32.mrb[0].mxu0
        %v1884 = vpop.f32.mrb[0].mxu0
        %v1885 = vadd.f32 %v1724, %v1884
        %v1886 = vpop.f32.mrb[0].mxu0
        %1887 = vmatprep.mubr.bf16.mxu0 %v835
        %1888 = vmatmul.mubr.bf16.gmra.mrb[0].mxu0 %v711
        %v1889 = vpop.f32.mrb[0].mxu0
        %v1890 = vadd.f32 %v1729, %v1889
        %v1891 = vpop.f32.mrb[0].mxu0
        %v1892 = vpop.f32.mrb[0].mxu0
        %v1893 = vadd.f32 %v1732, %v1892
        %v1894 = vpop.f32.mrb[0].mxu0
        %1895 = vmatprep.mubr.bf16.mxu0 %v838
        %1896 = vmatmul.mubr.bf16.gmra.mrb[0].mxu0 %v723
        %v1897 = vpop.f32.mrb[0].mxu0
        %v1898 = vadd.f32 %v1737, %v1897
        %v1899 = vpop.f32.mrb[0].mxu0
        %v1900 = vpop.f32.mrb[0].mxu0
        %v1901 = vadd.f32 %v1740, %v1900
        %v1902 = vpop.f32.mrb[0].mxu0
        %1903 = vmatprep.mubr.bf16.mxu0 %v841
        %1904 = vmatmul.mubr.bf16.gmra.mrb[0].mxu0 %v735
        %v1905 = vpop.f32.mrb[0].mxu0
        %v1906 = vadd.f32 %v1745, %v1905
        %v1907 = vpop.f32.mrb[0].mxu0
        %v1908 = vpop.f32.mrb[0].mxu0
        %v1909 = vadd.f32 %v1748, %v1908
        %v1910 = vpop.f32.mrb[0].mxu0
        %1911 = vmatprep.mubr.bf16.mxu0 %v844
        %1912 = vmatmul.mubr.bf16.gmra.mrb[0].mxu0 %v747
        %v1913 = vpop.f32.mrb[0].mxu0
        %v1914 = vadd.f32 %v1753, %v1913
        %v1915 = vpop.f32.mrb[0].mxu0
        %v1916 = vpop.f32.mrb[0].mxu0
        %v1917 = vadd.f32 %v1756, %v1916
        %v1918 = vpop.f32.mrb[0].mxu0
        %1919 = vdwg.mxu0
        %1920 = vmatprep.subr.bf16.mxu0 0
        %1921 = vmatpush1.bf16.msra.mxu0 %v1341
        %1922 = vmatprep.subr.bf16.mxu0 0
        %1923 = vmatpush1.bf16.msra.mxu0 %v1342
        %1924 = vmatprep.subr.bf16.mxu0 0
        %1925 = vmatpush1.bf16.msra.mxu0 %v1343
        %1926 = vmatprep.subr.bf16.mxu0 0
        %1927 = vmatpush1.bf16.msra.mxu0 %v1344
        %1928 = vmatprep.subr.bf16.mxu0 0
        %1929 = vmatpush1.bf16.msra.mxu0 %v1345
        %1930 = vmatprep.subr.bf16.mxu0 0
        %1931 = vmatpush1.bf16.msra.mxu0 %v1346
        %1932 = vmatprep.subr.bf16.mxu0 0
        %1933 = vmatpush1.bf16.msra.mxu0 %v1347
        %1934 = vmatprep.subr.bf16.mxu0 0
        %1935 = vmatpush1.bf16.msra.mxu0 %v1348
        %1936 = vmatprep.subr.bf16.mxu0 0
        %1937 = vmatpush1.bf16.msra.mxu0 %v1349
        %1938 = vmatprep.subr.bf16.mxu0 0
        %1939 = vmatpush1.bf16.msra.mxu0 %v1350
        %1940 = vmatprep.subr.bf16.mxu0 0
        %1941 = vmatpush1.bf16.msra.mxu0 %v1351
        %1942 = vmatprep.subr.bf16.mxu0 0
        %1943 = vmatpush1.bf16.msra.mxu0 %v1352
        %1944 = vmatprep.subr.bf16.mxu0 0
        %1945 = vmatpush1.bf16.msra.mxu0 %v1353
        %1946 = vmatprep.subr.bf16.mxu0 0
        %1947 = vmatpush1.bf16.msra.mxu0 %v1354
        %1948 = vmatprep.subr.bf16.mxu0 0
        %1949 = vmatpush1.bf16.msra.mxu0 %v1355
        %1950 = vmatprep.subr.bf16.mxu0 0
        %1951 = vmatpush1.bf16.msra.mxu0 %v1356
        %1952 = vmatprep.mubr.bf16.mxu0 %v579
        %1953 = vmatmul.mubr.bf16.gmra.mrb[0].mxu0 %v524
        %v1954 = vpop.f32.mrb[0].mxu0
        %v1955 = vadd.f32 %v1794, %v1954
        %v1956 = vpop.f32.mrb[0].mxu0
        %v1957 = vpop.f32.mrb[0].mxu0
        %v1958 = vadd.f32 %v1797, %v1957
        %v1959 = vpop.f32.mrb[0].mxu0
        %1960 = vmatprep.mubr.bf16.mxu0 %v591
        %1961 = vmatmul.mubr.bf16.gmra.mrb[0].mxu0 %v525
        %v1962 = vpop.f32.mrb[0].mxu0
        %v1963 = vadd.f32 %v1802, %v1962
        %v1964 = vpop.f32.mrb[0].mxu0
        %v1965 = vpop.f32.mrb[0].mxu0
        %v1966 = vadd.f32 %v1805, %v1965
        %v1967 = vpop.f32.mrb[0].mxu0
        %1968 = vmatprep.mubr.bf16.mxu0 %v603
        %1969 = vmatmul.mubr.bf16.gmra.mrb[0].mxu0 %v526
        %v1970 = vpop.f32.mrb[0].mxu0
        %v1971 = vadd.f32 %v1810, %v1970
        %v1972 = vpop.f32.mrb[0].mxu0
        %v1973 = vpop.f32.mrb[0].mxu0
        %v1974 = vadd.f32 %v1813, %v1973
        %v1975 = vpop.f32.mrb[0].mxu0
        %1976 = vmatprep.mubr.bf16.mxu0 %v615
        %1977 = vmatmul.mubr.bf16.gmra.mrb[0].mxu0 %v527
        %v1978 = vpop.f32.mrb[0].mxu0
        %v1979 = vadd.f32 %v1818, %v1978
        %v1980 = vpop.f32.mrb[0].mxu0
        %v1981 = vpop.f32.mrb[0].mxu0
        %v1982 = vadd.f32 %v1821, %v1981
        %v1983 = vpop.f32.mrb[0].mxu0
        %1984 = vmatprep.mubr.bf16.mxu0 %v627
        %1985 = vmatmul.mubr.bf16.gmra.mrb[0].mxu0 %v528
        %v1986 = vpop.f32.mrb[0].mxu0
        %v1987 = vadd.f32 %v1826, %v1986
        %v1988 = vpop.f32.mrb[0].mxu0
        %v1989 = vpop.f32.mrb[0].mxu0
        %v1990 = vadd.f32 %v1829, %v1989
        %v1991 = vpop.f32.mrb[0].mxu0
        %1992 = vmatprep.mubr.bf16.mxu0 %v639
        %1993 = vmatmul.mubr.bf16.gmra.mrb[0].mxu0 %v529
        %v1994 = vpop.f32.mrb[0].mxu0
        %v1995 = vadd.f32 %v1834, %v1994
        %v1996 = vpop.f32.mrb[0].mxu0
        %v1997 = vpop.f32.mrb[0].mxu0
        %v1998 = vadd.f32 %v1837, %v1997
        %v1999 = vpop.f32.mrb[0].mxu0
        %2000 = vmatprep.mubr.bf16.mxu0 %v651
        %2001 = vmatmul.mubr.bf16.gmra.mrb[0].mxu0 %v530
        %v2002 = vpop.f32.mrb[0].mxu0
        %v2003 = vadd.f32 %v1842, %v2002
        %v2004 = vpop.f32.mrb[0].mxu0
        %v2005 = vpop.f32.mrb[0].mxu0
        %v2006 = vadd.f32 %v1845, %v2005
        %v2007 = vpop.f32.mrb[0].mxu0
        %2008 = vmatprep.mubr.bf16.mxu0 %v663
        %2009 = vmatmul.mubr.bf16.gmra.mrb[0].mxu0 %v531
        %v2010 = vpop.f32.mrb[0].mxu0
        %v2011 = vadd.f32 %v1850, %v2010
        %v2012 = vpop.f32.mrb[0].mxu0
        %v2013 = vpop.f32.mrb[0].mxu0
        %v2014 = vadd.f32 %v1853, %v2013
        %v2015 = vpop.f32.mrb[0].mxu0
        %2016 = vmatprep.mubr.bf16.mxu0 %v675
        %2017 = vmatmul.mubr.bf16.gmra.mrb[0].mxu0 %v532
        %v2018 = vpop.f32.mrb[0].mxu0
        %v2019 = vadd.f32 %v1858, %v2018
        %v2020 = vpop.f32.mrb[0].mxu0
        %v2021 = vpop.f32.mrb[0].mxu0
        %v2022 = vadd.f32 %v1861, %v2021
        %v2023 = vpop.f32.mrb[0].mxu0
        %2024 = vmatprep.mubr.bf16.mxu0 %v687
        %2025 = vmatmul.mubr.bf16.gmra.mrb[0].mxu0 %v533
        %v2026 = vpop.f32.mrb[0].mxu0
        %v2027 = vadd.f32 %v1866, %v2026
        %v2028 = vpop.f32.mrb[0].mxu0
        %v2029 = vpop.f32.mrb[0].mxu0
        %v2030 = vadd.f32 %v1869, %v2029
        %v2031 = vpop.f32.mrb[0].mxu0
        %2032 = vmatprep.mubr.bf16.mxu0 %v699
        %2033 = vmatmul.mubr.bf16.gmra.mrb[0].mxu0 %v534
        %v2034 = vpop.f32.mrb[0].mxu0
        %v2035 = vadd.f32 %v1874, %v2034
        %v2036 = vpop.f32.mrb[0].mxu0
        %v2037 = vpop.f32.mrb[0].mxu0
        %v2038 = vadd.f32 %v1877, %v2037
        %v2039 = vpop.f32.mrb[0].mxu0
        %2040 = vmatprep.mubr.bf16.mxu0 %v711
        %2041 = vmatmul.mubr.bf16.gmra.mrb[0].mxu0 %v535
        %v2042 = vpop.f32.mrb[0].mxu0
        %v2043 = vadd.f32 %v1882, %v2042
        %v2044 = vpop.f32.mrb[0].mxu0
        %v2045 = vpop.f32.mrb[0].mxu0
        %v2046 = vadd.f32 %v1885, %v2045
        %v2047 = vpop.f32.mrb[0].mxu0
        %2048 = vmatprep.mubr.bf16.mxu0 %v723
        %2049 = vmatmul.mubr.bf16.gmra.mrb[0].mxu0 %v536
        %v2050 = vpop.f32.mrb[0].mxu0
        %v2051 = vadd.f32 %v1890, %v2050
        %v2052 = vpop.f32.mrb[0].mxu0
        %v2053 = vpop.f32.mrb[0].mxu0
        %v2054 = vadd.f32 %v1893, %v2053
        %v2055 = vpop.f32.mrb[0].mxu0
        %2056 = vmatprep.mubr.bf16.mxu0 %v735
        %2057 = vmatmul.mubr.bf16.gmra.mrb[0].mxu0 %v537
        %v2058 = vpop.f32.mrb[0].mxu0
        %v2059 = vadd.f32 %v1898, %v2058
        %v2060 = vpop.f32.mrb[0].mxu0
        %v2061 = vpop.f32.mrb[0].mxu0
        %v2062 = vadd.f32 %v1901, %v2061
        %v2063 = vpop.f32.mrb[0].mxu0
        %2064 = vmatprep.mubr.bf16.mxu0 %v747
        %2065 = vmatmul.mubr.bf16.gmra.mrb[0].mxu0 %v538
        %v2066 = vpop.f32.mrb[0].mxu0
        %v2067 = vadd.f32 %v1906, %v2066
        %v2068 = vpop.f32.mrb[0].mxu0
        %v2069 = vpop.f32.mrb[0].mxu0
        %v2070 = vadd.f32 %v1909, %v2069
        %v2071 = vpop.f32.mrb[0].mxu0
        %2072 = vmatprep.mubr.bf16.mxu0 0
        %2073 = vmatmul.mubr.bf16.gmra.mrb[0].mxu0 0
        %v2074 = vpop.f32.mrb[0].mxu0
        %v2075 = vadd.f32 %v1914, %v2074
        %v2076 = vpop.f32.mrb[0].mxu0
        %v2077 = vpop.f32.mrb[0].mxu0
        %v2078 = vadd.f32 %v1917, %v2077
        %v2079 = vpop.f32.mrb[0].mxu0
        %2080 = vdwg.mxu0
        %2081 = vmatprep.subr.bf16.mxu0 0
        %2082 = vmatpush1.bf16.msra.mxu0 %v1357
        %2083 = vmatprep.subr.bf16.mxu0 0
        %2084 = vmatpush1.bf16.msra.mxu0 %v1358
        %2085 = vmatprep.subr.bf16.mxu0 0
        %2086 = vmatpush1.bf16.msra.mxu0 %v1359
        %2087 = vmatprep.subr.bf16.mxu0 0
        %2088 = vmatpush1.bf16.msra.mxu0 %v1360
        %2089 = vmatprep.subr.bf16.mxu0 0
        %2090 = vmatpush1.bf16.msra.mxu0 %v1361
        %2091 = vmatprep.subr.bf16.mxu0 0
        %2092 = vmatpush1.bf16.msra.mxu0 %v1362
        %2093 = vmatprep.subr.bf16.mxu0 0
        %2094 = vmatpush1.bf16.msra.mxu0 %v1363
        %2095 = vmatprep.subr.bf16.mxu0 0
        %2096 = vmatpush1.bf16.msra.mxu0 %v1364
        %2097 = vmatprep.subr.bf16.mxu0 0
        %2098 = vmatpush1.bf16.msra.mxu0 0
        %2099 = vmatprep.subr.bf16.mxu0 0
        %2100 = vmatpush1.bf16.msra.mxu0 0
        %2101 = vmatprep.subr.bf16.mxu0 0
        %2102 = vmatpush1.bf16.msra.mxu0 0
        %2103 = vmatprep.subr.bf16.mxu0 0
        %2104 = vmatpush1.bf16.msra.mxu0 0
        %2105 = vmatprep.subr.bf16.mxu0 0
        %2106 = vmatpush1.bf16.msra.mxu0 0
        %2107 = vmatprep.subr.bf16.mxu0 0
        %2108 = vmatpush1.bf16.msra.mxu0 0
        %2109 = vmatprep.subr.bf16.mxu0 0
        %2110 = vmatpush1.bf16.msra.mxu0 0
        %2111 = vmatprep.subr.bf16.mxu0 0
        %2112 = vmatpush1.bf16.msra.mxu0 0
        %2113 = vmatprep.mubr.bf16.mxu0 0
        %2114 = vmatmul.mubr.bf16.gmra.mrb[0].mxu0 %v802
        %v2115 = vpop.f32.mrb[0].mxu0
        %v2116 = vadd.f32 %v1955, %v2115
        %v2117 = vpop.f32.mrb[0].mxu0
        %v2118 = vpop.f32.mrb[0].mxu0
        %v2119 = vadd.f32 %v1958, %v2118
        %v2120 = vpop.f32.mrb[0].mxu0
        %2121 = vmatprep.mubr.bf16.mxu0 0
        %2122 = vmatmul.mubr.bf16.gmra.mrb[0].mxu0 %v805
        %v2123 = vpop.f32.mrb[0].mxu0
        %v2124 = vadd.f32 %v1963, %v2123
        %v2125 = vpop.f32.mrb[0].mxu0
        %v2126 = vpop.f32.mrb[0].mxu0
        %v2127 = vadd.f32 %v1966, %v2126
        %v2128 = vpop.f32.mrb[0].mxu0
        %2129 = vmatprep.mubr.bf16.mxu0 0
        %2130 = vmatmul.mubr.bf16.gmra.mrb[0].mxu0 %v808
        %v2131 = vpop.f32.mrb[0].mxu0
        %v2132 = vadd.f32 %v1971, %v2131
        %v2133 = vpop.f32.mrb[0].mxu0
        %v2134 = vpop.f32.mrb[0].mxu0
        %v2135 = vadd.f32 %v1974, %v2134
        %v2136 = vpop.f32.mrb[0].mxu0
        %2137 = vmatprep.mubr.bf16.mxu0 0
        %2138 = vmatmul.mubr.bf16.gmra.mrb[0].mxu0 %v811
        %v2139 = vpop.f32.mrb[0].mxu0
        %v2140 = vadd.f32 %v1979, %v2139
        %v2141 = vpop.f32.mrb[0].mxu0
        %v2142 = vpop.f32.mrb[0].mxu0
        %v2143 = vadd.f32 %v1982, %v2142
        %v2144 = vpop.f32.mrb[0].mxu0
        %2145 = vmatprep.mubr.bf16.mxu0 0
        %2146 = vmatmul.mubr.bf16.gmra.mrb[0].mxu0 %v814
        %v2147 = vpop.f32.mrb[0].mxu0
        %v2148 = vadd.f32 %v1987, %v2147
        %v2149 = vpop.f32.mrb[0].mxu0
        %v2150 = vpop.f32.mrb[0].mxu0
        %v2151 = vadd.f32 %v1990, %v2150
        %v2152 = vpop.f32.mrb[0].mxu0
        %2153 = vmatprep.mubr.bf16.mxu0 0
        %2154 = vmatmul.mubr.bf16.gmra.mrb[0].mxu0 %v817
        %v2155 = vpop.f32.mrb[0].mxu0
        %v2156 = vadd.f32 %v1995, %v2155
        %v2157 = vpop.f32.mrb[0].mxu0
        %v2158 = vpop.f32.mrb[0].mxu0
        %v2159 = vadd.f32 %v1998, %v2158
        %v2160 = vpop.f32.mrb[0].mxu0
        %2161 = vmatprep.mubr.bf16.mxu0 0
        %2162 = vmatmul.mubr.bf16.gmra.mrb[0].mxu0 %v820
        %v2163 = vpop.f32.mrb[0].mxu0
        %v2164 = vadd.f32 %v2003, %v2163
        %v2165 = vpop.f32.mrb[0].mxu0
        %v2166 = vpop.f32.mrb[0].mxu0
        %v2167 = vadd.f32 %v2006, %v2166
        %v2168 = vpop.f32.mrb[0].mxu0
        %2169 = vmatprep.mubr.bf16.mxu0 0
        %2170 = vmatmul.mubr.bf16.gmra.mrb[0].mxu0 %v823
        %v2171 = vpop.f32.mrb[0].mxu0
        %v2172 = vadd.f32 %v2011, %v2171
        %v2173 = vpop.f32.mrb[0].mxu0
        %v2174 = vpop.f32.mrb[0].mxu0
        %v2175 = vadd.f32 %v2014, %v2174
        %v2176 = vpop.f32.mrb[0].mxu0
        %2177 = vmatprep.mubr.bf16.mxu0 0
        %2178 = vmatmul.mubr.bf16.gmra.mrb[0].mxu0 %v826
        %v2179 = vpop.f32.mrb[0].mxu0
        %v2180 = vadd.f32 %v2019, %v2179
        %v2181 = vpop.f32.mrb[0].mxu0
        %v2182 = vpop.f32.mrb[0].mxu0
        %v2183 = vadd.f32 %v2022, %v2182
        %v2184 = vpop.f32.mrb[0].mxu0
        %2185 = vmatprep.mubr.bf16.mxu0 0
        %2186 = vmatmul.mubr.bf16.gmra.mrb[0].mxu0 %v829
        %v2187 = vpop.f32.mrb[0].mxu0
        %v2188 = vadd.f32 %v2027, %v2187
        %v2189 = vpop.f32.mrb[0].mxu0
        %v2190 = vpop.f32.mrb[0].mxu0
        %v2191 = vadd.f32 %v2030, %v2190
        %v2192 = vpop.f32.mrb[0].mxu0
        %2193 = vmatprep.mubr.bf16.mxu0 0
        %2194 = vmatmul.mubr.bf16.gmra.mrb[0].mxu0 %v832
        %v2195 = vpop.f32.mrb[0].mxu0
        %v2196 = vadd.f32 %v2035, %v2195
        %v2197 = vpop.f32.mrb[0].mxu0
        %v2198 = vpop.f32.mrb[0].mxu0
        %v2199 = vadd.f32 %v2038, %v2198
        %v2200 = vpop.f32.mrb[0].mxu0
        %2201 = vmatprep.mubr.bf16.mxu0 0
        %2202 = vmatmul.mubr.bf16.gmra.mrb[0].mxu0 %v835
        %v2203 = vpop.f32.mrb[0].mxu0
        %v2204 = vadd.f32 %v2043, %v2203
        %v2205 = vpop.f32.mrb[0].mxu0
        %v2206 = vpop.f32.mrb[0].mxu0
        %v2207 = vadd.f32 %v2046, %v2206
        %v2208 = vpop.f32.mrb[0].mxu0
        %2209 = vmatprep.mubr.bf16.mxu0 0
        %2210 = vmatmul.mubr.bf16.gmra.mrb[0].mxu0 %v838
        %v2211 = vpop.f32.mrb[0].mxu0
        %v2212 = vadd.f32 %v2051, %v2211
        %v2213 = vpop.f32.mrb[0].mxu0
        %v2214 = vpop.f32.mrb[0].mxu0
        %v2215 = vadd.f32 %v2054, %v2214
        %v2216 = vpop.f32.mrb[0].mxu0
        %2217 = vmatprep.mubr.bf16.mxu0 0
        %2218 = vmatmul.mubr.bf16.gmra.mrb[0].mxu0 %v841
        %v2219 = vpop.f32.mrb[0].mxu0
        %v2220 = vadd.f32 %v2059, %v2219
        %v2221 = vpop.f32.mrb[0].mxu0
        %v2222 = vpop.f32.mrb[0].mxu0
        %v2223 = vadd.f32 %v2062, %v2222
        %v2224 = vpop.f32.mrb[0].mxu0
        %2225 = vmatprep.mubr.bf16.mxu0 0
        %2226 = vmatmul.mubr.bf16.gmra.mrb[0].mxu0 %v844
        %v2227 = vpop.f32.mrb[0].mxu0
        %v2228 = vadd.f32 %v2067, %v2227
        %v2229 = vpop.f32.mrb[0].mxu0
        %v2230 = vpop.f32.mrb[0].mxu0
        %v2231 = vadd.f32 %v2070, %v2230
        %v2232 = vpop.f32.mrb[0].mxu0
        %2233 = vmatprep.mubr.bf16.mxu0 0
        %2234 = vmatmul.mubr.bf16.gmra.mrb[0].mxu0 0
        %v2235 = vpop.f32.mrb[0].mxu0
        %v2236 = vadd.f32 %v2075, %v2235
        %v2237 = vpop.f32.mrb[0].mxu0
        %v2238 = vpop.f32.mrb[0].mxu0
        %v2239 = vadd.f32 %v2078, %v2238
        %v2240 = vpop.f32.mrb[0].mxu0
        %2241 = vdwg.mxu0
        %2242 = vst [vmem:[%s305] sm:$0xff] %v2116
        %2243 = vst [vmem:[%s305 + $0x8] sm:$0xff] %v2119
        %2244 = vst [vmem:[%s305 + $0x10] sm:$0xff] %v2124
        %2245 = vst [vmem:[%s305 + $0x18] sm:$0xff] %v2127
        %2246 = vst [vmem:[%s305 + $0x20] sm:$0xff] %v2132
        %2247 = vst [vmem:[%s305 + $0x28] sm:$0xff] %v2135
        %2248 = vst [vmem:[%s305 + $0x30] sm:$0xff] %v2140
        %2249 = vst [vmem:[%s305 + $0x38] sm:$0xff] %v2143
        %2250 = vst [vmem:[%s305 + $0x40] sm:$0xff] %v2148
        %2251 = vst [vmem:[%s305 + $0x48] sm:$0xff] %v2151
        %2252 = vst [vmem:[%s305 + $0x50] sm:$0xff] %v2156
        %2253 = vst [vmem:[%s305 + $0x58] sm:$0xff] %v2159
        %2254 = vst [vmem:[%s305 + $0x60] sm:$0xff] %v2164
        %2255 = vst [vmem:[%s305 + $0x68] sm:$0xff] %v2167
        %2256 = vst [vmem:[%s305 + $0x70] sm:$0xff] %v2172
        %2257 = vst [vmem:[%s305 + $0x78] sm:$0xff] %v2175
        %2258 = vst [vmem:[%s305 + $0x80] sm:$0xff] %v2180
        %2259 = vst [vmem:[%s305 + $0x88] sm:$0xff] %v2183
        %2260 = vst [vmem:[%s305 + $0x90] sm:$0xff] %v2188
        %2261 = vst [vmem:[%s305 + $0x98] sm:$0xff] %v2191
        %2262 = vst [vmem:[%s305 + $0xa0] sm:$0xff] %v2196
        %2263 = vst [vmem:[%s305 + $0xa8] sm:$0xff] %v2199
        %2264 = vst [vmem:[%s305 + $0xb0] sm:$0xff] %v2204
        %2265 = vst [vmem:[%s305 + $0xb8] sm:$0xff] %v2207
        %2266 = vst [vmem:[%s305 + $0xc0] sm:$0xff] %v2212
        %2267 = vst [vmem:[%s305 + $0xc8] sm:$0xff] %v2215
        %2268 = vst [vmem:[%s305 + $0xd0] sm:$0xff] %v2220
        %2269 = vst [vmem:[%s305 + $0xd8] sm:$0xff] %v2223
        %2270 = vst [vmem:[%s305 + $0xe0] sm:$0xff] %v2228
        %2271 = vst [vmem:[%s305 + $0xe8] sm:$0xff] %v2231
        %2272 = vst [vmem:[%s305 + $0xf0] sm:$0xff] %v2236
        %2273 = vst [vmem:[%s305 + $0xf8] sm:$0xff] %v2239
        %v2274 = vadd.f32 %v2116, %v2119
        %v2275 = vadd.f32 %v2274, %v2124
        %v2276 = vadd.f32 %v2275, %v2127
        %v2277 = vadd.f32 %v2276, %v2132
        %v2278 = vadd.f32 %v2277, %v2135
        %v2279 = vadd.f32 %v2278, %v2140
        %v2280 = vadd.f32 %v2279, %v2143
        %v2281 = vadd.f32 %v2280, %v2148
        %v2282 = vadd.f32 %v2281, %v2151
        %v2283 = vadd.f32 %v2282, %v2156
        %v2284 = vadd.f32 %v2283, %v2159
        %v2285 = vadd.f32 %v2284, %v2164
        %v2286 = vadd.f32 %v2285, %v2167
        %v2287 = vadd.f32 %v2286, %v2172
        %v2288 = vadd.f32 %v2287, %v2175
        %v2289 = vadd.f32 %v2288, %v2180
        %v2290 = vadd.f32 %v2289, %v2183
        %v2291 = vadd.f32 %v2290, %v2188
        %v2292 = vadd.f32 %v2291, %v2191
        %v2293 = vadd.f32 %v2292, %v2196
        %v2294 = vadd.f32 %v2293, %v2199
        %v2295 = vadd.f32 %v2294, %v2204
        %v2296 = vadd.f32 %v2295, %v2207
        %v2297 = vadd.f32 %v2296, %v2212
        %v2298 = vadd.f32 %v2297, %v2215
        %v2299 = vadd.f32 %v2298, %v2220
        %v2300 = vadd.f32 %v2299, %v2223
        %v2301 = vadd.f32 %v2300, %v2228
        %v2302 = vadd.f32 %v2301, %v2231
        %v2303 = vadd.f32 %v2302, %v2236
        %v2304 = vadd.f32 %v2303, %v2239
        %v2305 = vrot.slane %v2304, 4
        %v2306 = vadd.f32 %v2304, %v2305
        %v2307 = vrot.slane %v2306, 2
        %v2308 = vadd.f32 %v2306, %v2307
        %v2309 = vrot.slane %v2308, 1
        %v2310 = vadd.f32 %v2308, %v2309
        %v2311 = vadd.f32 %v2310, 0.0
        %v2312 = vmul.f32 %v2116, %v2116
        %v2313 = vmul.f32 %v2119, %v2119
        %v2314 = vmul.f32 %v2124, %v2124
        %v2315 = vmul.f32 %v2127, %v2127
        %v2316 = vmul.f32 %v2132, %v2132
        %v2317 = vmul.f32 %v2135, %v2135
        %v2318 = vmul.f32 %v2140, %v2140
        %v2319 = vmul.f32 %v2143, %v2143
        %v2320 = vmul.f32 %v2148, %v2148
        %v2321 = vmul.f32 %v2151, %v2151
        %v2322 = vmul.f32 %v2156, %v2156
        %v2323 = vmul.f32 %v2159, %v2159
        %v2324 = vmul.f32 %v2164, %v2164
        %v2325 = vmul.f32 %v2167, %v2167
        %v2326 = vmul.f32 %v2172, %v2172
        %v2327 = vmul.f32 %v2175, %v2175
        %v2328 = vmul.f32 %v2180, %v2180
        %v2329 = vmul.f32 %v2183, %v2183
        %v2330 = vmul.f32 %v2188, %v2188
        %v2331 = vmul.f32 %v2191, %v2191
        %v2332 = vmul.f32 %v2196, %v2196
        %v2333 = vmul.f32 %v2199, %v2199
        %v2334 = vmul.f32 %v2204, %v2204
        %v2335 = vmul.f32 %v2207, %v2207
        %v2336 = vmul.f32 %v2212, %v2212
        %v2337 = vmul.f32 %v2215, %v2215
        %v2338 = vmul.f32 %v2220, %v2220
        %v2339 = vmul.f32 %v2223, %v2223
        %v2340 = vmul.f32 %v2228, %v2228
        %v2341 = vmul.f32 %v2231, %v2231
        %v2342 = vmul.f32 %v2236, %v2236
        %v2343 = vmul.f32 %v2239, %v2239
        %v2344 = vadd.f32 %v2312, %v2313
        %v2345 = vadd.f32 %v2344, %v2314
        %v2346 = vadd.f32 %v2345, %v2315
        %v2347 = vadd.f32 %v2346, %v2316
        %v2348 = vadd.f32 %v2347, %v2317
        %v2349 = vadd.f32 %v2348, %v2318
        %v2350 = vadd.f32 %v2349, %v2319
        %v2351 = vadd.f32 %v2350, %v2320
        %v2352 = vadd.f32 %v2351, %v2321
        %v2353 = vadd.f32 %v2352, %v2322
        %v2354 = vadd.f32 %v2353, %v2323
        %v2355 = vadd.f32 %v2354, %v2324
        %v2356 = vadd.f32 %v2355, %v2325
        %v2357 = vadd.f32 %v2356, %v2326
        %v2358 = vadd.f32 %v2357, %v2327
        %v2359 = vadd.f32 %v2358, %v2328
        %v2360 = vadd.f32 %v2359, %v2329
        %v2361 = vadd.f32 %v2360, %v2330
        %v2362 = vadd.f32 %v2361, %v2331
        %v2363 = vadd.f32 %v2362, %v2332
        %v2364 = vadd.f32 %v2363, %v2333
        %v2365 = vadd.f32 %v2364, %v2334
        %v2366 = vadd.f32 %v2365, %v2335
        %v2367 = vadd.f32 %v2366, %v2336
        %v2368 = vadd.f32 %v2367, %v2337
        %v2369 = vadd.f32 %v2368, %v2338
        %v2370 = vadd.f32 %v2369, %v2339
        %v2371 = vadd.f32 %v2370, %v2340
        %v2372 = vadd.f32 %v2371, %v2341
        %v2373 = vadd.f32 %v2372, %v2342
        %v2374 = vadd.f32 %v2373, %v2343
        %v2375 = vrot.slane %v2374, 4
        %v2376 = vadd.f32 %v2374, %v2375
        %v2377 = vrot.slane %v2376, 2
        %v2378 = vadd.f32 %v2376, %v2377
        %v2379 = vrot.slane %v2378, 1
        %v2380 = vadd.f32 %v2378, %v2379
        %v2381 = vadd.f32 %v2380, 0.0
        %vm2382 = vcmask 1040384
        %v2383 = vsel %vm2382, %v2311, %v2381
        %2384 = vst [vmem:[%s312] sm:$0x3] %v2383
        %v2385 = vld [vmem:[#allocation7] sm:$0xf]
        %v2386 = vld [vmem:[#allocation7 + $0x4] sm:$0xf]
        %v2387 = vld [vmem:[#allocation7 + $0x8] sm:$0xf]
        %v2388 = vld [vmem:[#allocation7 + $0xc] sm:$0xf]
        %v2389 = vld [vmem:[#allocation7 + $0x10] sm:$0xf]
        %v2390 = vld [vmem:[#allocation7 + $0x14] sm:$0xf]
        %v2391 = vld [vmem:[#allocation7 + $0x18] sm:$0xf]
        %v2392 = vld [vmem:[#allocation7 + $0x1c] sm:$0xf]
        %v2393 = vld [vmem:[#allocation7 + $0x20] sm:$0xf]
        %v2394 = vld [vmem:[#allocation7 + $0x24] sm:$0xf]
        %v2395 = vld [vmem:[#allocation7 + $0x28] sm:$0xf]
        %v2396 = vld [vmem:[#allocation7 + $0x2c] sm:$0xf]
        %v2397 = vld [vmem:[#allocation7 + $0x30] sm:$0xf]
        %v2398 = vld [vmem:[#allocation7 + $0x34] sm:$0xf]
        %v2399 = vld [vmem:[#allocation7 + $0x38] sm:$0xf]
        %v2400 = vld [vmem:[#allocation7 + $0x3c] sm:$0xf]
        %v2417 = vunpack.c.l.b16 %v2385
        %v2418 = vunpack.c.l.b16 %v2386
        %v2419 = vunpack.c.l.b16 %v2387
        %v2420 = vunpack.c.l.b16 %v2388
        %v2421 = vunpack.c.l.b16 %v2389
        %v2422 = vunpack.c.l.b16 %v2390
        %v2423 = vunpack.c.l.b16 %v2391
        %v2424 = vunpack.c.l.b16 %v2392
        %v2425 = vunpack.c.l.b16 %v2393
        %v2426 = vunpack.c.l.b16 %v2394
        %v2427 = vunpack.c.l.b16 %v2395
        %v2428 = vunpack.c.l.b16 %v2396
        %v2429 = vunpack.c.l.b16 %v2397
        %v2430 = vunpack.c.l.b16 %v2398
        %v2431 = vunpack.c.l.b16 %v2399
        %v2432 = vunpack.c.l.b16 %v2400
        %v2433 = vpack.c.b16 %v2418, %v2417
        %v2434 = vpack.c.b16 %v2420, %v2419
        %v2435 = vpack.c.b16 %v2422, %v2421
        %v2436 = vpack.c.b16 %v2424, %v2423
        %v2437 = vpack.c.b16 %v2426, %v2425
        %v2438 = vpack.c.b16 %v2428, %v2427
        %v2439 = vpack.c.b16 %v2430, %v2429
        %v2440 = vpack.c.b16 %v2432, %v2431
        %2449 = vmatprep.subr.bf16.mxu0 0
        %2450 = vmatpush1.bf16.msra.mxu0 %v2433
        %2451 = vmatprep.subr.bf16.mxu0 0
        %2452 = vmatpush1.bf16.msra.mxu0 %v2434
        %2453 = vmatprep.subr.bf16.mxu0 0
        %2454 = vmatpush1.bf16.msra.mxu0 %v2435
        %2455 = vmatprep.subr.bf16.mxu0 0
        %2456 = vmatpush1.bf16.msra.mxu0 %v2436
        %2457 = vmatprep.subr.bf16.mxu0 0
        %2458 = vmatpush1.bf16.msra.mxu0 %v2437
        %2459 = vmatprep.subr.bf16.mxu0 0
        %2460 = vmatpush1.bf16.msra.mxu0 %v2438
        %2461 = vmatprep.subr.bf16.mxu0 0
        %2462 = vmatpush1.bf16.msra.mxu0 %v2439
        %2463 = vmatprep.subr.bf16.mxu0 0
        %2464 = vmatpush1.bf16.msra.mxu0 %v2440
        %2465 = vmatprep.subr.bf16.mxu0 0
        %2466 = vmatpush1.bf16.msra.mxu0 0
        %2467 = vmatprep.subr.bf16.mxu0 0
        %2468 = vmatpush1.bf16.msra.mxu0 0
        %2469 = vmatprep.subr.bf16.mxu0 0
        %2470 = vmatpush1.bf16.msra.mxu0 0
        %2471 = vmatprep.subr.bf16.mxu0 0
        %2472 = vmatpush1.bf16.msra.mxu0 0
        %2473 = vmatprep.subr.bf16.mxu0 0
        %2474 = vmatpush1.bf16.msra.mxu0 0
        %2475 = vmatprep.subr.bf16.mxu0 0
        %2476 = vmatpush1.bf16.msra.mxu0 0
        %2477 = vmatprep.subr.bf16.mxu0 0
        %2478 = vmatpush1.bf16.msra.mxu0 0
        %2479 = vmatprep.subr.bf16.mxu0 0
        %2480 = vmatpush1.bf16.msra.mxu0 0
        %2481 = vmatprep.mubr.bf16.mxu0 0
        %2482 = vmatmul.mubr.bf16.gmra.mrb[0].mxu0 %v360
        %v2483 = vpop.f32.mrb[0].mxu0
        %v2484 = vadd.f32 0.0, %v2483
        %v2485 = vpop.f32.mrb[0].mxu0
        %v2486 = vpop.f32.mrb[0].mxu0
        %v2487 = vadd.f32 0.0, %v2486
        %v2488 = vpop.f32.mrb[0].mxu0
        %2489 = vmatprep.mubr.bf16.mxu0 0
        %2490 = vmatmul.mubr.bf16.gmra.mrb[0].mxu0 %v361
        %v2491 = vpop.f32.mrb[0].mxu0
        %v2492 = vadd.f32 0.0, %v2491
        %v2493 = vpop.f32.mrb[0].mxu0
        %v2494 = vpop.f32.mrb[0].mxu0
        %v2495 = vadd.f32 0.0, %v2494
        %v2496 = vpop.f32.mrb[0].mxu0
        %2497 = vmatprep.mubr.bf16.mxu0 0
        %2498 = vmatmul.mubr.bf16.gmra.mrb[0].mxu0 %v362
        %v2499 = vpop.f32.mrb[0].mxu0
        %v2500 = vadd.f32 0.0, %v2499
        %v2501 = vpop.f32.mrb[0].mxu0
        %v2502 = vpop.f32.mrb[0].mxu0
        %v2503 = vadd.f32 0.0, %v2502
        %v2504 = vpop.f32.mrb[0].mxu0
        %2505 = vmatprep.mubr.bf16.mxu0 0
        %2506 = vmatmul.mubr.bf16.gmra.mrb[0].mxu0 %v363
        %v2507 = vpop.f32.mrb[0].mxu0
        %v2508 = vadd.f32 0.0, %v2507
        %v2509 = vpop.f32.mrb[0].mxu0
        %v2510 = vpop.f32.mrb[0].mxu0
        %v2511 = vadd.f32 0.0, %v2510
        %v2512 = vpop.f32.mrb[0].mxu0
        %2513 = vmatprep.mubr.bf16.mxu0 0
        %2514 = vmatmul.mubr.bf16.gmra.mrb[0].mxu0 %v364
        %v2515 = vpop.f32.mrb[0].mxu0
        %v2516 = vadd.f32 0.0, %v2515
        %v2517 = vpop.f32.mrb[0].mxu0
        %v2518 = vpop.f32.mrb[0].mxu0
        %v2519 = vadd.f32 0.0, %v2518
        %v2520 = vpop.f32.mrb[0].mxu0
        %2521 = vmatprep.mubr.bf16.mxu0 0
        %2522 = vmatmul.mubr.bf16.gmra.mrb[0].mxu0 %v365
        %v2523 = vpop.f32.mrb[0].mxu0
        %v2524 = vadd.f32 0.0, %v2523
        %v2525 = vpop.f32.mrb[0].mxu0
        %v2526 = vpop.f32.mrb[0].mxu0
        %v2527 = vadd.f32 0.0, %v2526
        %v2528 = vpop.f32.mrb[0].mxu0
        %2529 = vmatprep.mubr.bf16.mxu0 0
        %2530 = vmatmul.mubr.bf16.gmra.mrb[0].mxu0 %v366
        %v2531 = vpop.f32.mrb[0].mxu0
        %v2532 = vadd.f32 0.0, %v2531
        %v2533 = vpop.f32.mrb[0].mxu0
        %v2534 = vpop.f32.mrb[0].mxu0
        %v2535 = vadd.f32 0.0, %v2534
        %v2536 = vpop.f32.mrb[0].mxu0
        %2537 = vmatprep.mubr.bf16.mxu0 0
        %2538 = vmatmul.mubr.bf16.gmra.mrb[0].mxu0 %v367
        %v2539 = vpop.f32.mrb[0].mxu0
        %v2540 = vadd.f32 0.0, %v2539
        %v2541 = vpop.f32.mrb[0].mxu0
        %v2542 = vpop.f32.mrb[0].mxu0
        %v2543 = vadd.f32 0.0, %v2542
        %v2544 = vpop.f32.mrb[0].mxu0
        %2545 = vmatprep.mubr.bf16.mxu0 0
        %2546 = vmatmul.mubr.bf16.gmra.mrb[0].mxu0 %v368
        %v2547 = vpop.f32.mrb[0].mxu0
        %v2548 = vadd.f32 0.0, %v2547
        %v2549 = vpop.f32.mrb[0].mxu0
        %v2550 = vpop.f32.mrb[0].mxu0
        %v2551 = vadd.f32 0.0, %v2550
        %v2552 = vpop.f32.mrb[0].mxu0
        %2553 = vmatprep.mubr.bf16.mxu0 0
        %2554 = vmatmul.mubr.bf16.gmra.mrb[0].mxu0 %v369
        %v2555 = vpop.f32.mrb[0].mxu0
        %v2556 = vadd.f32 0.0, %v2555
        %v2557 = vpop.f32.mrb[0].mxu0
        %v2558 = vpop.f32.mrb[0].mxu0
        %v2559 = vadd.f32 0.0, %v2558
        %v2560 = vpop.f32.mrb[0].mxu0
        %2561 = vmatprep.mubr.bf16.mxu0 0
        %2562 = vmatmul.mubr.bf16.gmra.mrb[0].mxu0 %v370
        %v2563 = vpop.f32.mrb[0].mxu0
        %v2564 = vadd.f32 0.0, %v2563
        %v2565 = vpop.f32.mrb[0].mxu0
        %v2566 = vpop.f32.mrb[0].mxu0
        %v2567 = vadd.f32 0.0, %v2566
        %v2568 = vpop.f32.mrb[0].mxu0
        %2569 = vmatprep.mubr.bf16.mxu0 0
        %2570 = vmatmul.mubr.bf16.gmra.mrb[0].mxu0 %v371
        %v2571 = vpop.f32.mrb[0].mxu0
        %v2572 = vadd.f32 0.0, %v2571
        %v2573 = vpop.f32.mrb[0].mxu0
        %v2574 = vpop.f32.mrb[0].mxu0
        %v2575 = vadd.f32 0.0, %v2574
        %v2576 = vpop.f32.mrb[0].mxu0
        %2577 = vmatprep.mubr.bf16.mxu0 0
        %2578 = vmatmul.mubr.bf16.gmra.mrb[0].mxu0 %v372
        %v2579 = vpop.f32.mrb[0].mxu0
        %v2580 = vadd.f32 0.0, %v2579
        %v2581 = vpop.f32.mrb[0].mxu0
        %v2582 = vpop.f32.mrb[0].mxu0
        %v2583 = vadd.f32 0.0, %v2582
        %v2584 = vpop.f32.mrb[0].mxu0
        %2585 = vmatprep.mubr.bf16.mxu0 0
        %2586 = vmatmul.mubr.bf16.gmra.mrb[0].mxu0 %v373
        %v2587 = vpop.f32.mrb[0].mxu0
        %v2588 = vadd.f32 0.0, %v2587
        %v2589 = vpop.f32.mrb[0].mxu0
        %v2590 = vpop.f32.mrb[0].mxu0
        %v2591 = vadd.f32 0.0, %v2590
        %v2592 = vpop.f32.mrb[0].mxu0
        %2593 = vmatprep.mubr.bf16.mxu0 0
        %2594 = vmatmul.mubr.bf16.gmra.mrb[0].mxu0 %v374
        %v2595 = vpop.f32.mrb[0].mxu0
        %v2596 = vadd.f32 0.0, %v2595
        %v2597 = vpop.f32.mrb[0].mxu0
        %v2598 = vpop.f32.mrb[0].mxu0
        %v2599 = vadd.f32 0.0, %v2598
        %v2600 = vpop.f32.mrb[0].mxu0
        %2601 = vmatprep.mubr.bf16.mxu0 0
        %2602 = vmatmul.mubr.bf16.gmra.mrb[0].mxu0 %v375
        %v2603 = vpop.f32.mrb[0].mxu0
        %v2604 = vadd.f32 0.0, %v2603
        %v2605 = vpop.f32.mrb[0].mxu0
        %v2606 = vpop.f32.mrb[0].mxu0
        %v2607 = vadd.f32 0.0, %v2606
        %v2608 = vpop.f32.mrb[0].mxu0
        %2609 = vdwg.mxu0
        %2610 = vst [vmem:[%s319] sm:$0xff] %v2484
        %2611 = vst [vmem:[%s319 + $0x8] sm:$0xff] %v2487
        %2612 = vst [vmem:[%s319 + $0x10] sm:$0xff] %v2492
        %2613 = vst [vmem:[%s319 + $0x18] sm:$0xff] %v2495
        %2614 = vst [vmem:[%s319 + $0x20] sm:$0xff] %v2500
        %2615 = vst [vmem:[%s319 + $0x28] sm:$0xff] %v2503
        %2616 = vst [vmem:[%s319 + $0x30] sm:$0xff] %v2508
        %2617 = vst [vmem:[%s319 + $0x38] sm:$0xff] %v2511
        %2618 = vst [vmem:[%s319 + $0x40] sm:$0xff] %v2516
        %2619 = vst [vmem:[%s319 + $0x48] sm:$0xff] %v2519
        %2620 = vst [vmem:[%s319 + $0x50] sm:$0xff] %v2524
        %2621 = vst [vmem:[%s319 + $0x58] sm:$0xff] %v2527
        %2622 = vst [vmem:[%s319 + $0x60] sm:$0xff] %v2532
        %2623 = vst [vmem:[%s319 + $0x68] sm:$0xff] %v2535
        %2624 = vst [vmem:[%s319 + $0x70] sm:$0xff] %v2540
        %2625 = vst [vmem:[%s319 + $0x78] sm:$0xff] %v2543
        %2626 = vst [vmem:[%s319 + $0x80] sm:$0xff] %v2548
        %2627 = vst [vmem:[%s319 + $0x88] sm:$0xff] %v2551
        %2628 = vst [vmem:[%s319 + $0x90] sm:$0xff] %v2556
        %2629 = vst [vmem:[%s319 + $0x98] sm:$0xff] %v2559
        %2630 = vst [vmem:[%s319 + $0xa0] sm:$0xff] %v2564
        %2631 = vst [vmem:[%s319 + $0xa8] sm:$0xff] %v2567
        %2632 = vst [vmem:[%s319 + $0xb0] sm:$0xff] %v2572
        %2633 = vst [vmem:[%s319 + $0xb8] sm:$0xff] %v2575
        %2634 = vst [vmem:[%s319 + $0xc0] sm:$0xff] %v2580
        %2635 = vst [vmem:[%s319 + $0xc8] sm:$0xff] %v2583
        %2636 = vst [vmem:[%s319 + $0xd0] sm:$0xff] %v2588
        %2637 = vst [vmem:[%s319 + $0xd8] sm:$0xff] %v2591
        %2638 = vst [vmem:[%s319 + $0xe0] sm:$0xff] %v2596
        %2639 = vst [vmem:[%s319 + $0xe8] sm:$0xff] %v2599
        %2640 = vst [vmem:[%s319 + $0xf0] sm:$0xff] %v2604
        %2641 = vst [vmem:[%s319 + $0xf8] sm:$0xff] %v2607
        %v2642 = vadd.f32 %v2484, %v2487
        %v2643 = vadd.f32 %v2642, %v2492
        %v2644 = vadd.f32 %v2643, %v2495
        %v2645 = vadd.f32 %v2644, %v2500
        %v2646 = vadd.f32 %v2645, %v2503
        %v2647 = vadd.f32 %v2646, %v2508
        %v2648 = vadd.f32 %v2647, %v2511
        %v2649 = vadd.f32 %v2648, %v2516
        %v2650 = vadd.f32 %v2649, %v2519
        %v2651 = vadd.f32 %v2650, %v2524
        %v2652 = vadd.f32 %v2651, %v2527
        %v2653 = vadd.f32 %v2652, %v2532
        %v2654 = vadd.f32 %v2653, %v2535
        %v2655 = vadd.f32 %v2654, %v2540
        %v2656 = vadd.f32 %v2655, %v2543
        %v2657 = vadd.f32 %v2656, %v2548
        %v2658 = vadd.f32 %v2657, %v2551
        %v2659 = vadd.f32 %v2658, %v2556
        %v2660 = vadd.f32 %v2659, %v2559
        %v2661 = vadd.f32 %v2660, %v2564
        %v2662 = vadd.f32 %v2661, %v2567
        %v2663 = vadd.f32 %v2662, %v2572
        %v2664 = vadd.f32 %v2663, %v2575
        %v2665 = vadd.f32 %v2664, %v2580
        %v2666 = vadd.f32 %v2665, %v2583
        %v2667 = vadd.f32 %v2666, %v2588
        %v2668 = vadd.f32 %v2667, %v2591
        %v2669 = vadd.f32 %v2668, %v2596
        %v2670 = vadd.f32 %v2669, %v2599
        %v2671 = vadd.f32 %v2670, %v2604
        %v2672 = vadd.f32 %v2671, %v2607
        %v2673 = vrot.slane %v2672, 4
        %v2674 = vadd.f32 %v2672, %v2673
        %v2675 = vrot.slane %v2674, 2
        %v2676 = vadd.f32 %v2674, %v2675
        %v2677 = vrot.slane %v2676, 1
        %v2678 = vadd.f32 %v2676, %v2677
        %v2679 = vadd.f32 %v2678, 0.0
        %v2680 = vmul.f32 %v2484, %v2484
        %v2681 = vmul.f32 %v2487, %v2487
        %v2682 = vmul.f32 %v2492, %v2492
        %v2683 = vmul.f32 %v2495, %v2495
        %v2684 = vmul.f32 %v2500, %v2500
        %v2685 = vmul.f32 %v2503, %v2503
        %v2686 = vmul.f32 %v2508, %v2508
        %v2687 = vmul.f32 %v2511, %v2511
        %v2688 = vmul.f32 %v2516, %v2516
        %v2689 = vmul.f32 %v2519, %v2519
        %v2690 = vmul.f32 %v2524, %v2524
        %v2691 = vmul.f32 %v2527, %v2527
        %v2692 = vmul.f32 %v2532, %v2532
        %v2693 = vmul.f32 %v2535, %v2535
        %v2694 = vmul.f32 %v2540, %v2540
        %v2695 = vmul.f32 %v2543, %v2543
        %v2696 = vmul.f32 %v2548, %v2548
        %v2697 = vmul.f32 %v2551, %v2551
        %v2698 = vmul.f32 %v2556, %v2556
        %v2699 = vmul.f32 %v2559, %v2559
        %v2700 = vmul.f32 %v2564, %v2564
        %v2701 = vmul.f32 %v2567, %v2567
        %v2702 = vmul.f32 %v2572, %v2572
        %v2703 = vmul.f32 %v2575, %v2575
        %v2704 = vmul.f32 %v2580, %v2580
        %v2705 = vmul.f32 %v2583, %v2583
        %v2706 = vmul.f32 %v2588, %v2588
        %v2707 = vmul.f32 %v2591, %v2591
        %v2708 = vmul.f32 %v2596, %v2596
        %v2709 = vmul.f32 %v2599, %v2599
        %v2710 = vmul.f32 %v2604, %v2604
        %v2711 = vmul.f32 %v2607, %v2607
        %v2712 = vadd.f32 %v2680, %v2681
        %v2713 = vadd.f32 %v2712, %v2682
        %v2714 = vadd.f32 %v2713, %v2683
        %v2715 = vadd.f32 %v2714, %v2684
        %v2716 = vadd.f32 %v2715, %v2685
        %v2717 = vadd.f32 %v2716, %v2686
        %v2718 = vadd.f32 %v2717, %v2687
        %v2719 = vadd.f32 %v2718, %v2688
        %v2720 = vadd.f32 %v2719, %v2689
        %v2721 = vadd.f32 %v2720, %v2690
        %v2722 = vadd.f32 %v2721, %v2691
        %v2723 = vadd.f32 %v2722, %v2692
        %v2724 = vadd.f32 %v2723, %v2693
        %v2725 = vadd.f32 %v2724, %v2694
        %v2726 = vadd.f32 %v2725, %v2695
        %v2727 = vadd.f32 %v2726, %v2696
        %v2728 = vadd.f32 %v2727, %v2697
        %v2729 = vadd.f32 %v2728, %v2698
        %v2730 = vadd.f32 %v2729, %v2699
        %v2731 = vadd.f32 %v2730, %v2700
        %v2732 = vadd.f32 %v2731, %v2701
        %v2733 = vadd.f32 %v2732, %v2702
        %v2734 = vadd.f32 %v2733, %v2703
        %v2735 = vadd.f32 %v2734, %v2704
        %v2736 = vadd.f32 %v2735, %v2705
        %v2737 = vadd.f32 %v2736, %v2706
        %v2738 = vadd.f32 %v2737, %v2707
        %v2739 = vadd.f32 %v2738, %v2708
        %v2740 = vadd.f32 %v2739, %v2709
        %v2741 = vadd.f32 %v2740, %v2710
        %v2742 = vadd.f32 %v2741, %v2711
        %v2743 = vrot.slane %v2742, 4
        %v2744 = vadd.f32 %v2742, %v2743
        %v2745 = vrot.slane %v2744, 2
        %v2746 = vadd.f32 %v2744, %v2745
        %v2747 = vrot.slane %v2746, 1
        %v2748 = vadd.f32 %v2746, %v2747
        %v2749 = vadd.f32 %v2748, 0.0
        %v2750 = vsel %vm2382, %v2679, %v2749
        %2751 = vst [vmem:[%s326] sm:$0x3] %v2750
        %s2752 = sand.u32 %s107, 1
        %s2753 = scalar_lea.sflag [#allocation4], %s2752
        %s2754 = sand.u32 %s107, 1
        %s2755 = smul.addr %s2754, 256
        %s2756 = scalar_lea.vmem [#allocation8], %s2755
        %s2757 = sand.u32 %s31, 1
        %s2758 = scalar_lea.sflag [#allocation10], %s2757
        %s2759 = sand.u32 %s133, 1
        %s2760 = smul.addr %s2759, 2
        %s2761 = scalar_lea.vmem [#allocation9], %s2760
        %s2762 = sand.u32 %s31, 1
        %s2763 = scalar_lea.sflag [#allocation10], %s2762
        %s2764 = sand.u32 %s159, 1
        %s2765 = smul.addr %s2764, 256
        %s2766 = scalar_lea.vmem [#allocation11], %s2765
        %s2767 = sand.u32 %s185, 1
        %s2768 = scalar_lea.sflag [#allocation13], %s2767
        %s2769 = sand.u32 %s185, 1
        %s2770 = smul.addr %s2769, 2
        %s2771 = scalar_lea.vmem [#allocation12], %s2770
        // Predicated region
        $region45: #{tpu_custom_call.1} parent=31 // pred_check
          %p2772 = pneg %p117
        $region46: #{tpu_custom_call.1} parent=31 // pred_check_branch
          %2774 = sbr.rel (%p2772) target = $region48
        $region47: #{tpu_custom_call.1} parent=31 // pred_region
          %s2776 = ssub.s32 4096, 4096
          %2777 = vsyncadd %s2753, %s2776
          %s2778 = smul.addr %s31, 32
          %s2779 = smul.addr %s2778, 128
          %s2780 = scalar_lea.hbm %s3, %s2779
          %s2781 = sshll.u32 %s2756, 4
          %s2782 = int_to_ptr.vmem [resolvable:$true] %s2781
          %2787 = dma.vmem_to_hbm [thread:$0]  %s2782, 4096, %s2780, %s2753, 128, 128, 8
        $region48: #{tpu_custom_call.1} parent=31 // pred_fallthru
          _
        // Predicated region
        $region49: #{tpu_custom_call.1} parent=31 // pred_check
          %p2788 = pneg %p143
        $region50: #{tpu_custom_call.1} parent=31 // pred_check_branch
          %2790 = sbr.rel (%p2788) target = $region52
        $region51: #{tpu_custom_call.1} parent=31 // pred_region
          %s2792 = ssub.s32 32, 32
          %2793 = vsyncadd %s2758, %s2792
          %s2794 = smul.addr %s31, 32
          %s2795 = scalar_lea.hbm %s4, %s2794
          %s2797 = sshll.u32 %s2761, 4
          %s2798 = int_to_ptr.vmem [resolvable:$true] %s2797
          %2800 = dma.vmem_to_hbm [thread:$0]  %s2798, 32, %s2795, %s2758
        $region52: #{tpu_custom_call.1} parent=31 // pred_fallthru
          _
        // Predicated region
        $region53: #{tpu_custom_call.1} parent=31 // pred_check
          %p2801 = pneg %p169
        $region54: #{tpu_custom_call.1} parent=31 // pred_check_branch
          %2803 = sbr.rel (%p2801) target = $region56
        $region55: #{tpu_custom_call.1} parent=31 // pred_region
          %s2805 = ssub.s32 4096, 4096
          %2806 = vsyncadd %s2763, %s2805
          %s2807 = smul.addr %s31, 32
          %s2808 = smul.addr %s2807, 128
          %s2809 = scalar_lea.hbm %s5, %s2808
          %s2810 = sshll.u32 %s2766, 4
          %s2811 = int_to_ptr.vmem [resolvable:$true] %s2810
          %2816 = dma.vmem_to_hbm [thread:$0]  %s2811, 4096, %s2809, %s2763, 128, 128, 8
        $region56: #{tpu_custom_call.1} parent=31 // pred_fallthru
          _
        // Predicated region
        $region57: #{tpu_custom_call.1} parent=31 // pred_check
          %p2817 = pneg %p195
        $region58: #{tpu_custom_call.1} parent=31 // pred_check_branch
          %2819 = sbr.rel (%p2817) target = $region60
        $region59: #{tpu_custom_call.1} parent=31 // pred_region
          %s2821 = ssub.s32 32, 32
          %2822 = vsyncadd %s2768, %s2821
          %s2823 = smul.addr %s31, 32
          %s2824 = scalar_lea.hbm %s6, %s2823
          %s2826 = sshll.u32 %s2771, 4
          %s2827 = int_to_ptr.vmem [resolvable:$true] %s2826
          %2829 = dma.vmem_to_hbm [thread:$0]  %s2827, 32, %s2824, %s2768
        $region60: #{tpu_custom_call.1} parent=31 // pred_fallthru
          _
      $region32: #{tpu_custom_call.1} parent=5 // pred_fallthru
        _
      %p2830 = scmp.le.s32.totalorder 2, %s26
      // Predicated region
      $region61: #{tpu_custom_call.1} parent=5 // pred_check
        %p2831 = pneg %p2830
      $region62: #{tpu_custom_call.1} parent=5 // pred_check_branch
        %2833 = sbr.rel (%p2831) target = $region64
      $region63: #{tpu_custom_call.1} parent=5 // pred_region
        %s2834 = ssub.s32 %s26, 2
        // Predicated region
        $region65: #{tpu_custom_call.1} parent=63 // pred_check
          %p2835 = pneg %p123
        $region66: #{tpu_custom_call.1} parent=63 // pred_check_branch
          %2837 = sbr.rel (%p2835) target = $region68
        $region67: #{tpu_custom_call.1} parent=63 // pred_region
          %s2838 = sand.u32 %s108, 1
          %s2839 = scalar_lea.sflag [#allocation4], %s2838
          %s2840 = sand.u32 %s108, 1
          %s2841 = smul.addr %s2840, 256
          %s2842 = scalar_lea.vmem [#allocation8], %s2841
          %2843 = dma.done %s2839, 4096
        $region68: #{tpu_custom_call.1} parent=63 // pred_fallthru
          _
        // Predicated region
        $region69: #{tpu_custom_call.1} parent=63 // pred_check
          %p2844 = pneg %p149
        $region70: #{tpu_custom_call.1} parent=63 // pred_check_branch
          %2846 = sbr.rel (%p2844) target = $region72
        $region71: #{tpu_custom_call.1} parent=63 // pred_region
          %s2847 = sand.u32 %s32, 1
          %s2848 = scalar_lea.sflag [#allocation10], %s2847
          %s2849 = sand.u32 %s134, 1
          %s2850 = smul.addr %s2849, 2
          %s2851 = scalar_lea.vmem [#allocation9], %s2850
          %2852 = dma.done %s2848, 32
        $region72: #{tpu_custom_call.1} parent=63 // pred_fallthru
          _
        // Predicated region
        $region73: #{tpu_custom_call.1} parent=63 // pred_check
          %p2853 = pneg %p175
        $region74: #{tpu_custom_call.1} parent=63 // pred_check_branch
          %2855 = sbr.rel (%p2853) target = $region76
        $region75: #{tpu_custom_call.1} parent=63 // pred_region
          %s2856 = sand.u32 %s32, 1
          %s2857 = scalar_lea.sflag [#allocation10], %s2856
          %s2858 = sand.u32 %s160, 1
          %s2859 = smul.addr %s2858, 256
          %s2860 = scalar_lea.vmem [#allocation11], %s2859
          %2861 = dma.done %s2857, 4096
        $region76: #{tpu_custom_call.1} parent=63 // pred_fallthru
          _
        // Predicated region
        $region77: #{tpu_custom_call.1} parent=63 // pred_check
          %p2862 = pneg %p201
        $region78: #{tpu_custom_call.1} parent=63 // pred_check_branch
          %2864 = sbr.rel (%p2862) target = $region80
        $region79: #{tpu_custom_call.1} parent=63 // pred_region
          %s2865 = sand.u32 %s186, 1
          %s2866 = scalar_lea.sflag [#allocation13], %s2865
          %s2867 = sand.u32 %s186, 1
          %s2868 = smul.addr %s2867, 2
          %s2869 = scalar_lea.vmem [#allocation12], %s2868
          %2870 = dma.done %s2866, 32
        $region80: #{tpu_custom_call.1} parent=63 // pred_fallthru
          _
      $region64: #{tpu_custom_call.1} parent=5 // pred_fallthru
        _
    $region6: #{tpu_custom_call.1} parent=1 // loop_footer
      %s30 = sadd.s32 1, %s26
    $region7: #{tpu_custom_call.1} parent=1 // loop_footer_branch
      %25 = sbr.rel target = $region3
    $region8: #{tpu_custom_call.1} parent=1 // loop_exit
      _
    %2871 = vsyncpa [#allocation3], 1
    %s2872 = scalar_lea.sflag [#allocation3], 1
    %2873 = vsyncpa %s2872, 1
    %2874 = vsyncpa [#allocation6], 1
    %2875 = vsyncpa [#allocation4], 1
    %s2876 = scalar_lea.sflag [#allocation4], 1
    %2877 = vsyncpa %s2876, 1
    %2878 = vsyncpa [#allocation10], 1
    %s2879 = scalar_lea.sflag [#allocation10], 1
    %2880 = vsyncpa %s2879, 1
    %2881 = vsyncpa [#allocation13], 1
    %s2882 = scalar_lea.sflag [#allocation13], 1
    %2883 = vsyncpa %s2882, 1

</llo_original>
